<compile_context>
chip_gen: v5e
topology: v5e:2x2
jax: 0.10.0
libtpu: 0.0.40
codegen_flags: <defaults>
</compile_context>

<pallas_src>
from functools import partial

import jax
import jax.numpy as jnp
from jax import lax
from jax.experimental import pallas as pl
from jax.experimental.pallas import tpu as pltpu


def _round_up(v, m):
    return (v + m - 1) // m * m


# ------------------------------ Pallas kernel ------------------------------ #

def _double_conv_kernel(x_ref, m_ref, w1_ref, g1_ref, b1_ref,
                        w2_ref, g2_ref, b2_ref, o_ref,
                        p1_ref, p2_ref, *, H, W, NB):
    """One grid step = NB instances, fully fused conv->IN->ReLU x2 in VMEM.

    x_ref : (NB, Cin_p,  HW)  f32   input block (channels padded to mult. of 8)
    m_ref : (9, HW)           f32   per-tap boundary-validity masks
    w*_ref: (Co,  9*Ci_p)     bf16  packed 3x3 weights, k = (ky*3+kx)*Ci_p + ci
    g*/b* : (Co, 1)           f32   InstanceNorm gamma / beta (zero-padded rows)
    o_ref : (NB, Cout, HW)    f32   lane-dense output block
    p1/p2 : VMEM scratch (9*Ci_p, NB*HW) bf16 -- patch (im2col) buffers
    """
    HW = H * W
    masks = m_ref[...]                                        # (9, HW) f32

    def fill_patches(p_ref, get_inst, C):
        # Build the 9 shifted taps per instance; mask + bf16-cast fused, and
        # each tap is written straight into the scratch (no concatenate).
        for b in range(NB):
            xb = get_inst(b)                                  # (C, HW) f32
            k = 0
            for oy in (-1, 0, 1):
                for ox in (-1, 0, 1):
                    s = oy * W + ox
                    if s == 0:
                        tap = xb                              # center tap
                    else:
                        # tap[c, i] = x[c, i+s] (zero-padded): roll wraps,
                        # mask zeroes the out-of-image samples.
                        tap = pltpu.roll(xb, (-s) % HW, axis=1) * masks[k:k + 1, :]
                    p_ref[k * C:(k + 1) * C, b * HW:(b + 1) * HW] = \
                        tap.astype(jnp.bfloat16)
                    k += 1

    def conv_in_relu(p_ref, w_ref, g_ref, b_ref):
        # One wide-K bf16 MXU matmul, f32 accumulation.
        acc = jnp.dot(w_ref[...], p_ref[...],
                      preferred_element_type=jnp.float32)     # (Co, NB*HW) f32
        g = g_ref[...]                                        # (Co, 1)
        beta = b_ref[...]
        inv_hw = 1.0 / HW
        outs = []
        for b in range(NB):                                   # per-instance IN
            seg = acc[:, b * HW:(b + 1) * HW]                 # (Co, HW) f32
            mean = jnp.sum(seg, axis=1, keepdims=True) * inv_hw
            var = jnp.sum(seg * seg, axis=1, keepdims=True) * inv_hw - mean * mean
            scale = g * lax.rsqrt(var + 1e-5)                 # fold affine:
            shift = beta - mean * scale                       #   2 ops / element
            outs.append(jnp.maximum(seg * scale + shift, 0.0))
        return outs                                           # NB x (Co, HW) f32

    fill_patches(p1_ref, lambda b: x_ref[b], p1_ref.shape[0] // 9)
    y1 = conv_in_relu(p1_ref, w1_ref, g1_ref, b1_ref)         # NB x (Cmid_p, HW)
    fill_patches(p2_ref, lambda b: y1[b], p2_ref.shape[0] // 9)
    y2 = conv_in_relu(p2_ref, w2_ref, g2_ref, b2_ref)         # NB x (Cout, HW)
    for b in range(NB):
        o_ref[b] = y2[b].astype(o_ref.dtype)


# --------------------------------- wrapper ---------------------------------- #

def _boundary_masks(H, W):
    """(9, H*W) f32: 1.0 where the (dy,dx)-shifted sample lies inside the image."""
    idx = jnp.arange(H * W, dtype=jnp.int32)
    row = idx // W
    col = idx % W
    ms = []
    for oy in (-1, 0, 1):
        for ox in (-1, 0, 1):
            valid = ((row + oy >= 0) & (row + oy < H) &
                     (col + ox >= 0) & (col + ox < W))
            ms.append(valid)
    return jnp.stack(ms, axis=0).astype(jnp.float32)


def _pick_lane_batch(N, HW, target_lanes=1024):
    """Pack NB instances per grid step so the matmul N-dim is ~target_lanes."""
    nb = max(1, min(N, target_lanes // HW))
    while N % nb:
        nb -= 1
    return nb


def double_conv_forward(x_nchw, p, *, lane_batch=None):
    """DoubleConv.forward: NCHW in -> NCHW out (same spatial size)."""
    N, Cin, H, W = x_nchw.shape
    HW = H * W
    Cin_p = p["w1_mat"].shape[1] // 9
    Cmid_p = p["w1_mat"].shape[0]
    Cout = p["w2_mat"].shape[0]
    Cmid = p["g1"].shape[0]
    assert Cin_p == _round_up(Cin, 8)
    assert p["w2_mat"].shape[1] == 9 * Cmid_p

    NB = lane_batch if lane_batch is not None else _pick_lane_batch(N, HW)
    assert N % NB == 0

    x_flat = x_nchw.reshape(N, Cin, HW)          # free (contiguous) reshape
    if Cin_p != Cin:                              # sublane-align the K dim
        x_flat = jnp.pad(x_flat, ((0, 0), (0, Cin_p - Cin), (0, 0)))

    masks = _boundary_masks(H, W)
    g1 = jnp.pad(p["g1"], (0, Cmid_p - Cmid)).reshape(Cmid_p, 1)
    b1 = jnp.pad(p["b1"], (0, Cmid_p - Cmid)).reshape(Cmid_p, 1)
    g2 = p["g2"].reshape(Cout, 1)
    b2 = p["b2"].reshape(Cout, 1)

    out_flat = pl.pallas_call(
        partial(_double_conv_kernel, H=H, W=W, NB=NB),
        out_shape=jax.ShapeDtypeStruct((N, Cout, HW), jnp.float32),
        grid=(N // NB,),
        in_specs=[
            pl.BlockSpec((NB, Cin_p, HW), lambda n: (n, 0, 0)),
            pl.BlockSpec((9, HW), lambda n: (0, 0)),
            pl.BlockSpec((Cmid_p, 9 * Cin_p), lambda n: (0, 0)),
            pl.BlockSpec((Cmid_p, 1), lambda n: (0, 0)),
            pl.BlockSpec((Cmid_p, 1), lambda n: (0, 0)),
            pl.BlockSpec((Cout, 9 * Cmid_p), lambda n: (0, 0)),
            pl.BlockSpec((Cout, 1), lambda n: (0, 0)),
            pl.BlockSpec((Cout, 1), lambda n: (0, 0)),
        ],
        out_specs=pl.BlockSpec((NB, Cout, HW), lambda n: (n, 0, 0)),
        scratch_shapes=[
            pltpu.VMEM((9 * Cin_p, NB * HW), jnp.bfloat16),   # conv1 patches
            pltpu.VMEM((9 * Cmid_p, NB * HW), jnp.bfloat16),  # conv2 patches
        ],
        compiler_params=pltpu.CompilerParams(
            dimension_semantics=("parallel",),
            vmem_limit_bytes=48 * 1024 * 1024),
    )(x_flat, masks, p["w1_mat"], g1, b1, p["w2_mat"], g2, b2)

    return out_flat.reshape(N, Cout, H, W)       # free reshape


# ---------------------------- parameter setup ------------------------------ #

def _pack_conv_weight(w_oihw, cout_pad):
    """OIHW 3x3 weight -> (cout_pad, 9*ci_pad) bf16, k = (ky*3+kx)*ci_pad + ci."""
    co, ci, kh, kw = w_oihw.shape
    ci_p = _round_up(ci, 8)
    w = jnp.transpose(w_oihw, (0, 2, 3, 1))                  # (co, 3, 3, ci)
    w = jnp.pad(w, ((0, cout_pad - co), (0, 0), (0, 0), (0, ci_p - ci)))
    return w.reshape(cout_pad, kh * kw * ci_p).astype(jnp.bfloat16)


def init_params(key, cin, cout, mid=None):
    if mid is None:
        mid = cout
    k1, k2, k3, k4, k5, k6 = jax.random.split(key, 6)
    w1 = 0.1 * jax.random.normal(k1, (mid, cin, 3, 3), jnp.float32)    # OIHW
    w2 = 0.1 * jax.random.normal(k2, (cout, mid, 3, 3), jnp.float32)   # OIHW
    g1 = 1.0 + 0.1 * jax.random.normal(k3, (mid,), jnp.float32)
    b1 = 0.1 * jax.random.normal(k4, (mid,), jnp.float32)
    g2 = 1.0 + 0.1 * jax.random.normal(k5, (cout,), jnp.float32)
    b2 = 0.1 * jax.random.normal(k6, (cout,), jnp.float32)
    mid_p = _round_up(mid, 8)
    return dict(
        w1_oihw=w1, w2_oihw=w2,
        w1_mat=_pack_conv_weight(w1, mid_p),      # (mid_p, 9*cin_p)  bf16
        w2_mat=_pack_conv_weight(w2, cout),       # (cout,  9*mid_p)  bf16
        g1=g1, b1=b1, g2=g2, b2=b2,
    )


# ---------------------------- pure-JAX reference --------------------------- #

def ref_forward(x_nchw, p):
    def block(x, w, g, b):
        y = lax.conv_general_dilated(
            x, w, (1, 1), ((1, 1), (1, 1)),
            dimension_numbers=("NCHW", "OIHW", "NCHW"),
            precision=lax.Precision.HIGHEST)
        m = y.mean(axis=(2, 3), keepdims=True)
        v = ((y - m) ** 2).mean(axis=(2, 3), keepdims=True)
        y = (y - m) * lax.rsqrt(v + 1e-5)
        y = y * g[None, :, None, None] + b[None, :, None, None]
        return jnp.maximum(y, 0.0)

    x = block(x_nchw, p["w1_oihw"], p["g1"], p["b1"])
    x = block(x, p["w2_oihw"], p["g2"], p["b2"])
    return x


# ---------------------------------- main ------------------------------------ #

if __name__ == "__main__":
    key = jax.random.PRNGKey(0)
    kx, kp = jax.random.split(key)

    N, Cin, Cout, H, W = 2, 4, 8, 16, 16
    x = jax.random.normal(kx, (N, Cin, H, W), jnp.float32)
    params = init_params(kp, Cin, Cout)

    out = jax.block_until_ready(double_conv_forward(x, params))
    assert out.shape == (N, Cout, H, W), out.shape

    ref = ref_forward(x, params)
    err = float(jnp.max(jnp.abs(out - ref)))
    # bf16 MXU operands (f32 accumulation / IN stats) vs f32-HIGHEST reference.
    assert jnp.allclose(out, ref, rtol=2e-2, atol=2e-2), err

    print("KERNEL_OK")
</pallas_src>

<mosaic_0001>
module attributes {stable_mosaic.version = 11 : i64} {
  func.func @_double_conv_kernel(%arg0: i32, %arg1: memref<2x8x256xf32, #tpu.memory_space<vmem>>, %arg2: memref<9x256xf32, #tpu.memory_space<vmem>>, %arg3: memref<8x72xbf16, #tpu.memory_space<vmem>>, %arg4: memref<8x1xf32, #tpu.memory_space<vmem>>, %arg5: memref<8x1xf32, #tpu.memory_space<vmem>>, %arg6: memref<8x72xbf16, #tpu.memory_space<vmem>>, %arg7: memref<8x1xf32, #tpu.memory_space<vmem>>, %arg8: memref<8x1xf32, #tpu.memory_space<vmem>>, %arg9: memref<2x8x256xf32, #tpu.memory_space<vmem>>, %arg10: memref<72x512xbf16, #tpu.memory_space<vmem>>, %arg11: memref<72x512xbf16, #tpu.memory_space<vmem>>) attributes {dimension_semantics = [#tpu.dimension_semantics<parallel>], iteration_bounds = array<i64: 1>, scalar_prefetch = 0 : i64, scratch_operands = 2 : i64, tpu.core_type = #tpu.core_type<tc>, window_params = [{transform_indices = @transform_0, window_bounds = array<i64: 2, 8, 256>}, {pipeline_mode = #tpu.pipeline_mode<synchronous>, transform_indices = @transform_1, window_bounds = array<i64: 9, 256>}, {pipeline_mode = #tpu.pipeline_mode<synchronous>, transform_indices = @transform_2, window_bounds = array<i64: 8, 72>}, {pipeline_mode = #tpu.pipeline_mode<synchronous>, transform_indices = @transform_3, window_bounds = array<i64: 8, 1>}, {pipeline_mode = #tpu.pipeline_mode<synchronous>, transform_indices = @transform_4, window_bounds = array<i64: 8, 1>}, {pipeline_mode = #tpu.pipeline_mode<synchronous>, transform_indices = @transform_5, window_bounds = array<i64: 8, 72>}, {pipeline_mode = #tpu.pipeline_mode<synchronous>, transform_indices = @transform_6, window_bounds = array<i64: 8, 1>}, {pipeline_mode = #tpu.pipeline_mode<synchronous>, transform_indices = @transform_7, window_bounds = array<i64: 8, 1>}, {transform_indices = @transform_8, window_bounds = array<i64: 2, 8, 256>}]} {
    %c0 = arith.constant 0 : index
    %c0_0 = arith.constant 0 : index
    %0 = vector.load %arg2[%c0, %c0_0] : memref<9x256xf32, #tpu.memory_space<vmem>>, vector<9x256xf32>
    %c0_1 = arith.constant 0 : index
    %c0_2 = arith.constant 0 : index
    %c0_3 = arith.constant 0 : index
    %1 = vector.load %arg1[%c0_1, %c0_2, %c0_3] : memref<2x8x256xf32, #tpu.memory_space<vmem>>, vector<1x8x256xf32>
    %2 = vector.shape_cast %1 : vector<1x8x256xf32> to vector<8x256xf32>
    %c17_i32 = arith.constant 17 : i32
    %3 = tpu.dynamic_rotate %2 by %c17_i32 dim 1 : vector<8x256xf32>, i32 -> vector<8x256xf32>
    %4 = vector.extract_strided_slice %0 {offsets = [0, 0], sizes = [1, 256], strides = [1, 1]} : vector<9x256xf32> to vector<1x256xf32>
    %5 = vector.broadcast %4 : vector<1x256xf32> to vector<8x256xf32>
    %6 = arith.mulf %3, %5 : vector<8x256xf32>
    %7 = arith.truncf %6 : vector<8x256xf32> to vector<8x256xbf16>
    %c0_4 = arith.constant 0 : index
    %c0_5 = arith.constant 0 : index
    %8 = vector.load %arg10[%c0_4, %c0_5] : memref<72x512xbf16, #tpu.memory_space<vmem>>, vector<8x256xbf16>
    tpu.vector_store %arg10[%c0_4, %c0_5], %7 {strides = array<i32>} : memref<72x512xbf16, #tpu.memory_space<vmem>>, vector<8x256xbf16>,
    %c16_i32 = arith.constant 16 : i32
    %9 = tpu.dynamic_rotate %2 by %c16_i32 dim 1 : vector<8x256xf32>, i32 -> vector<8x256xf32>
    %10 = vector.extract_strided_slice %0 {offsets = [1, 0], sizes = [1, 256], strides = [1, 1]} : vector<9x256xf32> to vector<1x256xf32>
    %11 = vector.broadcast %10 : vector<1x256xf32> to vector<8x256xf32>
    %12 = arith.mulf %9, %11 : vector<8x256xf32>
    %13 = arith.truncf %12 : vector<8x256xf32> to vector<8x256xbf16>
    %c8 = arith.constant 8 : index
    %c0_6 = arith.constant 0 : index
    %14 = vector.load %arg10[%c8, %c0_6] : memref<72x512xbf16, #tpu.memory_space<vmem>>, vector<8x256xbf16>
    tpu.vector_store %arg10[%c8, %c0_6], %13 {strides = array<i32>} : memref<72x512xbf16, #tpu.memory_space<vmem>>, vector<8x256xbf16>,
    %c15_i32 = arith.constant 15 : i32
    %15 = tpu.dynamic_rotate %2 by %c15_i32 dim 1 : vector<8x256xf32>, i32 -> vector<8x256xf32>
    %16 = vector.extract_strided_slice %0 {offsets = [2, 0], sizes = [1, 256], strides = [1, 1]} : vector<9x256xf32> to vector<1x256xf32>
    %17 = vector.broadcast %16 : vector<1x256xf32> to vector<8x256xf32>
    %18 = arith.mulf %15, %17 : vector<8x256xf32>
    %19 = arith.truncf %18 : vector<8x256xf32> to vector<8x256xbf16>
    %c16 = arith.constant 16 : index
    %c0_7 = arith.constant 0 : index
    %20 = vector.load %arg10[%c16, %c0_7] : memref<72x512xbf16, #tpu.memory_space<vmem>>, vector<8x256xbf16>
    tpu.vector_store %arg10[%c16, %c0_7], %19 {strides = array<i32>} : memref<72x512xbf16, #tpu.memory_space<vmem>>, vector<8x256xbf16>,
    %c1_i32 = arith.constant 1 : i32
    %21 = tpu.dynamic_rotate %2 by %c1_i32 dim 1 : vector<8x256xf32>, i32 -> vector<8x256xf32>
    %22 = vector.extract_strided_slice %0 {offsets = [3, 0], sizes = [1, 256], strides = [1, 1]} : vector<9x256xf32> to vector<1x256xf32>
    %23 = vector.broadcast %22 : vector<1x256xf32> to vector<8x256xf32>
    %24 = arith.mulf %21, %23 : vector<8x256xf32>
    %25 = arith.truncf %24 : vector<8x256xf32> to vector<8x256xbf16>
    %c24 = arith.constant 24 : index
    %c0_8 = arith.constant 0 : index
    %26 = vector.load %arg10[%c24, %c0_8] : memref<72x512xbf16, #tpu.memory_space<vmem>>, vector<8x256xbf16>
    tpu.vector_store %arg10[%c24, %c0_8], %25 {strides = array<i32>} : memref<72x512xbf16, #tpu.memory_space<vmem>>, vector<8x256xbf16>,
    %27 = arith.truncf %2 : vector<8x256xf32> to vector<8x256xbf16>
    %c32 = arith.constant 32 : index
    %c0_9 = arith.constant 0 : index
    %28 = vector.load %arg10[%c32, %c0_9] : memref<72x512xbf16, #tpu.memory_space<vmem>>, vector<8x256xbf16>
    tpu.vector_store %arg10[%c32, %c0_9], %27 {strides = array<i32>} : memref<72x512xbf16, #tpu.memory_space<vmem>>, vector<8x256xbf16>,
    %c255_i32 = arith.constant 255 : i32
    %29 = tpu.dynamic_rotate %2 by %c255_i32 dim 1 : vector<8x256xf32>, i32 -> vector<8x256xf32>
    %30 = vector.extract_strided_slice %0 {offsets = [5, 0], sizes = [1, 256], strides = [1, 1]} : vector<9x256xf32> to vector<1x256xf32>
    %31 = vector.broadcast %30 : vector<1x256xf32> to vector<8x256xf32>
    %32 = arith.mulf %29, %31 : vector<8x256xf32>
    %33 = arith.truncf %32 : vector<8x256xf32> to vector<8x256xbf16>
    %c40 = arith.constant 40 : index
    %c0_10 = arith.constant 0 : index
    %34 = vector.load %arg10[%c40, %c0_10] : memref<72x512xbf16, #tpu.memory_space<vmem>>, vector<8x256xbf16>
    tpu.vector_store %arg10[%c40, %c0_10], %33 {strides = array<i32>} : memref<72x512xbf16, #tpu.memory_space<vmem>>, vector<8x256xbf16>,
    %c241_i32 = arith.constant 241 : i32
    %35 = tpu.dynamic_rotate %2 by %c241_i32 dim 1 : vector<8x256xf32>, i32 -> vector<8x256xf32>
    %36 = vector.extract_strided_slice %0 {offsets = [6, 0], sizes = [1, 256], strides = [1, 1]} : vector<9x256xf32> to vector<1x256xf32>
    %37 = vector.broadcast %36 : vector<1x256xf32> to vector<8x256xf32>
    %38 = arith.mulf %35, %37 : vector<8x256xf32>
    %39 = arith.truncf %38 : vector<8x256xf32> to vector<8x256xbf16>
    %c48 = arith.constant 48 : index
    %c0_11 = arith.constant 0 : index
    %40 = vector.load %arg10[%c48, %c0_11] : memref<72x512xbf16, #tpu.memory_space<vmem>>, vector<8x256xbf16>
    tpu.vector_store %arg10[%c48, %c0_11], %39 {strides = array<i32>} : memref<72x512xbf16, #tpu.memory_space<vmem>>, vector<8x256xbf16>,
    %c240_i32 = arith.constant 240 : i32
    %41 = tpu.dynamic_rotate %2 by %c240_i32 dim 1 : vector<8x256xf32>, i32 -> vector<8x256xf32>
    %42 = vector.extract_strided_slice %0 {offsets = [7, 0], sizes = [1, 256], strides = [1, 1]} : vector<9x256xf32> to vector<1x256xf32>
    %43 = vector.broadcast %42 : vector<1x256xf32> to vector<8x256xf32>
    %44 = arith.mulf %41, %43 : vector<8x256xf32>
    %45 = arith.truncf %44 : vector<8x256xf32> to vector<8x256xbf16>
    %c56 = arith.constant 56 : index
    %c0_12 = arith.constant 0 : index
    %46 = vector.load %arg10[%c56, %c0_12] : memref<72x512xbf16, #tpu.memory_space<vmem>>, vector<8x256xbf16>
    tpu.vector_store %arg10[%c56, %c0_12], %45 {strides = array<i32>} : memref<72x512xbf16, #tpu.memory_space<vmem>>, vector<8x256xbf16>,
    %c239_i32 = arith.constant 239 : i32
    %47 = tpu.dynamic_rotate %2 by %c239_i32 dim 1 : vector<8x256xf32>, i32 -> vector<8x256xf32>
    %48 = vector.extract_strided_slice %0 {offsets = [8, 0], sizes = [1, 256], strides = [1, 1]} : vector<9x256xf32> to vector<1x256xf32>
    %49 = vector.broadcast %48 : vector<1x256xf32> to vector<8x256xf32>
    %50 = arith.mulf %47, %49 : vector<8x256xf32>
    %51 = arith.truncf %50 : vector<8x256xf32> to vector<8x256xbf16>
    %c64 = arith.constant 64 : index
    %c0_13 = arith.constant 0 : index
    %52 = vector.load %arg10[%c64, %c0_13] : memref<72x512xbf16, #tpu.memory_space<vmem>>, vector<8x256xbf16>
    tpu.vector_store %arg10[%c64, %c0_13], %51 {strides = array<i32>} : memref<72x512xbf16, #tpu.memory_space<vmem>>, vector<8x256xbf16>,
    %c1 = arith.constant 1 : index
    %c0_14 = arith.constant 0 : index
    %c0_15 = arith.constant 0 : index
    %53 = vector.load %arg1[%c1, %c0_14, %c0_15] : memref<2x8x256xf32, #tpu.memory_space<vmem>>, vector<1x8x256xf32>
    %54 = vector.shape_cast %53 : vector<1x8x256xf32> to vector<8x256xf32>
    %c17_i32_16 = arith.constant 17 : i32
    %55 = tpu.dynamic_rotate %54 by %c17_i32_16 dim 1 : vector<8x256xf32>, i32 -> vector<8x256xf32>
    %56 = vector.extract_strided_slice %0 {offsets = [0, 0], sizes = [1, 256], strides = [1, 1]} : vector<9x256xf32> to vector<1x256xf32>
    %57 = vector.broadcast %56 : vector<1x256xf32> to vector<8x256xf32>
    %58 = arith.mulf %55, %57 : vector<8x256xf32>
    %59 = arith.truncf %58 : vector<8x256xf32> to vector<8x256xbf16>
    %c0_17 = arith.constant 0 : index
    %c256 = arith.constant 256 : index
    %60 = vector.load %arg10[%c0_17, %c256] : memref<72x512xbf16, #tpu.memory_space<vmem>>, vector<8x256xbf16>
    tpu.vector_store %arg10[%c0_17, %c256], %59 {strides = array<i32>} : memref<72x512xbf16, #tpu.memory_space<vmem>>, vector<8x256xbf16>,
    %c16_i32_18 = arith.constant 16 : i32
    %61 = tpu.dynamic_rotate %54 by %c16_i32_18 dim 1 : vector<8x256xf32>, i32 -> vector<8x256xf32>
    %62 = vector.extract_strided_slice %0 {offsets = [1, 0], sizes = [1, 256], strides = [1, 1]} : vector<9x256xf32> to vector<1x256xf32>
    %63 = vector.broadcast %62 : vector<1x256xf32> to vector<8x256xf32>
    %64 = arith.mulf %61, %63 : vector<8x256xf32>
    %65 = arith.truncf %64 : vector<8x256xf32> to vector<8x256xbf16>
    %c8_19 = arith.constant 8 : index
    %c256_20 = arith.constant 256 : index
    %66 = vector.load %arg10[%c8_19, %c256_20] : memref<72x512xbf16, #tpu.memory_space<vmem>>, vector<8x256xbf16>
    tpu.vector_store %arg10[%c8_19, %c256_20], %65 {strides = array<i32>} : memref<72x512xbf16, #tpu.memory_space<vmem>>, vector<8x256xbf16>,
    %c15_i32_21 = arith.constant 15 : i32
    %67 = tpu.dynamic_rotate %54 by %c15_i32_21 dim 1 : vector<8x256xf32>, i32 -> vector<8x256xf32>
    %68 = vector.extract_strided_slice %0 {offsets = [2, 0], sizes = [1, 256], strides = [1, 1]} : vector<9x256xf32> to vector<1x256xf32>
    %69 = vector.broadcast %68 : vector<1x256xf32> to vector<8x256xf32>
    %70 = arith.mulf %67, %69 : vector<8x256xf32>
    %71 = arith.truncf %70 : vector<8x256xf32> to vector<8x256xbf16>
    %c16_22 = arith.constant 16 : index
    %c256_23 = arith.constant 256 : index
    %72 = vector.load %arg10[%c16_22, %c256_23] : memref<72x512xbf16, #tpu.memory_space<vmem>>, vector<8x256xbf16>
    tpu.vector_store %arg10[%c16_22, %c256_23], %71 {strides = array<i32>} : memref<72x512xbf16, #tpu.memory_space<vmem>>, vector<8x256xbf16>,
    %c1_i32_24 = arith.constant 1 : i32
    %73 = tpu.dynamic_rotate %54 by %c1_i32_24 dim 1 : vector<8x256xf32>, i32 -> vector<8x256xf32>
    %74 = vector.extract_strided_slice %0 {offsets = [3, 0], sizes = [1, 256], strides = [1, 1]} : vector<9x256xf32> to vector<1x256xf32>
    %75 = vector.broadcast %74 : vector<1x256xf32> to vector<8x256xf32>
    %76 = arith.mulf %73, %75 : vector<8x256xf32>
    %77 = arith.truncf %76 : vector<8x256xf32> to vector<8x256xbf16>
    %c24_25 = arith.constant 24 : index
    %c256_26 = arith.constant 256 : index
    %78 = vector.load %arg10[%c24_25, %c256_26] : memref<72x512xbf16, #tpu.memory_space<vmem>>, vector<8x256xbf16>
    tpu.vector_store %arg10[%c24_25, %c256_26], %77 {strides = array<i32>} : memref<72x512xbf16, #tpu.memory_space<vmem>>, vector<8x256xbf16>,
    %79 = arith.truncf %54 : vector<8x256xf32> to vector<8x256xbf16>
    %c32_27 = arith.constant 32 : index
    %c256_28 = arith.constant 256 : index
    %80 = vector.load %arg10[%c32_27, %c256_28] : memref<72x512xbf16, #tpu.memory_space<vmem>>, vector<8x256xbf16>
    tpu.vector_store %arg10[%c32_27, %c256_28], %79 {strides = array<i32>} : memref<72x512xbf16, #tpu.memory_space<vmem>>, vector<8x256xbf16>,
    %c255_i32_29 = arith.constant 255 : i32
    %81 = tpu.dynamic_rotate %54 by %c255_i32_29 dim 1 : vector<8x256xf32>, i32 -> vector<8x256xf32>
    %82 = vector.extract_strided_slice %0 {offsets = [5, 0], sizes = [1, 256], strides = [1, 1]} : vector<9x256xf32> to vector<1x256xf32>
    %83 = vector.broadcast %82 : vector<1x256xf32> to vector<8x256xf32>
    %84 = arith.mulf %81, %83 : vector<8x256xf32>
    %85 = arith.truncf %84 : vector<8x256xf32> to vector<8x256xbf16>
    %c40_30 = arith.constant 40 : index
    %c256_31 = arith.constant 256 : index
    %86 = vector.load %arg10[%c40_30, %c256_31] : memref<72x512xbf16, #tpu.memory_space<vmem>>, vector<8x256xbf16>
    tpu.vector_store %arg10[%c40_30, %c256_31], %85 {strides = array<i32>} : memref<72x512xbf16, #tpu.memory_space<vmem>>, vector<8x256xbf16>,
    %c241_i32_32 = arith.constant 241 : i32
    %87 = tpu.dynamic_rotate %54 by %c241_i32_32 dim 1 : vector<8x256xf32>, i32 -> vector<8x256xf32>
    %88 = vector.extract_strided_slice %0 {offsets = [6, 0], sizes = [1, 256], strides = [1, 1]} : vector<9x256xf32> to vector<1x256xf32>
    %89 = vector.broadcast %88 : vector<1x256xf32> to vector<8x256xf32>
    %90 = arith.mulf %87, %89 : vector<8x256xf32>
    %91 = arith.truncf %90 : vector<8x256xf32> to vector<8x256xbf16>
    %c48_33 = arith.constant 48 : index
    %c256_34 = arith.constant 256 : index
    %92 = vector.load %arg10[%c48_33, %c256_34] : memref<72x512xbf16, #tpu.memory_space<vmem>>, vector<8x256xbf16>
    tpu.vector_store %arg10[%c48_33, %c256_34], %91 {strides = array<i32>} : memref<72x512xbf16, #tpu.memory_space<vmem>>, vector<8x256xbf16>,
    %c240_i32_35 = arith.constant 240 : i32
    %93 = tpu.dynamic_rotate %54 by %c240_i32_35 dim 1 : vector<8x256xf32>, i32 -> vector<8x256xf32>
    %94 = vector.extract_strided_slice %0 {offsets = [7, 0], sizes = [1, 256], strides = [1, 1]} : vector<9x256xf32> to vector<1x256xf32>
    %95 = vector.broadcast %94 : vector<1x256xf32> to vector<8x256xf32>
    %96 = arith.mulf %93, %95 : vector<8x256xf32>
    %97 = arith.truncf %96 : vector<8x256xf32> to vector<8x256xbf16>
    %c56_36 = arith.constant 56 : index
    %c256_37 = arith.constant 256 : index
    %98 = vector.load %arg10[%c56_36, %c256_37] : memref<72x512xbf16, #tpu.memory_space<vmem>>, vector<8x256xbf16>
    tpu.vector_store %arg10[%c56_36, %c256_37], %97 {strides = array<i32>} : memref<72x512xbf16, #tpu.memory_space<vmem>>, vector<8x256xbf16>,
    %c239_i32_38 = arith.constant 239 : i32
    %99 = tpu.dynamic_rotate %54 by %c239_i32_38 dim 1 : vector<8x256xf32>, i32 -> vector<8x256xf32>
    %100 = vector.extract_strided_slice %0 {offsets = [8, 0], sizes = [1, 256], strides = [1, 1]} : vector<9x256xf32> to vector<1x256xf32>
    %101 = vector.broadcast %100 : vector<1x256xf32> to vector<8x256xf32>
    %102 = arith.mulf %99, %101 : vector<8x256xf32>
    %103 = arith.truncf %102 : vector<8x256xf32> to vector<8x256xbf16>
    %c64_39 = arith.constant 64 : index
    %c256_40 = arith.constant 256 : index
    %104 = vector.load %arg10[%c64_39, %c256_40] : memref<72x512xbf16, #tpu.memory_space<vmem>>, vector<8x256xbf16>
    tpu.vector_store %arg10[%c64_39, %c256_40], %103 {strides = array<i32>} : memref<72x512xbf16, #tpu.memory_space<vmem>>, vector<8x256xbf16>,
    %c0_41 = arith.constant 0 : index
    %c0_42 = arith.constant 0 : index
    %105 = vector.load %arg3[%c0_41, %c0_42] : memref<8x72xbf16, #tpu.memory_space<vmem>>, vector<8x72xbf16>
    %c0_43 = arith.constant 0 : index
    %c0_44 = arith.constant 0 : index
    %106 = vector.load %arg10[%c0_43, %c0_44] : memref<72x512xbf16, #tpu.memory_space<vmem>>, vector<72x512xbf16>
    %cst = arith.constant dense<0.000000e+00> : vector<8x512xf32>
    %107 = tpu.matmul %105, %106, %cst {dimension_numbers = #tpu.dot_dimension_numbers<[1], [0], [0], [1], [0, 0, 1, 1], [], []>} : vector<8x72xbf16>, vector<72x512xbf16>, vector<8x512xf32> -> vector<8x512xf32>
    %c0_45 = arith.constant 0 : index
    %c0_46 = arith.constant 0 : index
    %108 = vector.load %arg4[%c0_45, %c0_46] : memref<8x1xf32, #tpu.memory_space<vmem>>, vector<8x1xf32>
    %c0_47 = arith.constant 0 : index
    %c0_48 = arith.constant 0 : index
    %109 = vector.load %arg5[%c0_47, %c0_48] : memref<8x1xf32, #tpu.memory_space<vmem>>, vector<8x1xf32>
    %110 = vector.extract_strided_slice %107 {offsets = [0, 0], sizes = [8, 256], strides = [1, 1]} : vector<8x512xf32> to vector<8x256xf32>
    %cst_49 = arith.constant dense<0.000000e+00> : vector<8xf32>
    %111 = vector.multi_reduction <add>, %110, %cst_49 [1] : vector<8x256xf32> to vector<8xf32>
    %112 = vector.shape_cast %111 : vector<8xf32> to vector<8x1xf32>
    %cst_50 = arith.constant 3.906250e-03 : f32
    %113 = vector.broadcast %cst_50 : f32 to vector<8x1xf32>
    %114 = arith.mulf %112, %113 : vector<8x1xf32>
    %115 = arith.mulf %110, %110 : vector<8x256xf32>
    %cst_51 = arith.constant dense<0.000000e+00> : vector<8xf32>
    %116 = vector.multi_reduction <add>, %115, %cst_51 [1] : vector<8x256xf32> to vector<8xf32>
    %117 = vector.shape_cast %116 : vector<8xf32> to vector<8x1xf32>
    %cst_52 = arith.constant 3.906250e-03 : f32
    %118 = vector.broadcast %cst_52 : f32 to vector<8x1xf32>
    %119 = arith.mulf %117, %118 : vector<8x1xf32>
    %120 = arith.mulf %114, %114 : vector<8x1xf32>
    %121 = arith.subf %119, %120 : vector<8x1xf32>
    %cst_53 = arith.constant 9.99999974E-6 : f32
    %122 = vector.broadcast %cst_53 : f32 to vector<8x1xf32>
    %123 = arith.addf %121, %122 : vector<8x1xf32>
    %124 = math.rsqrt %123 : vector<8x1xf32>
    %125 = arith.mulf %108, %124 : vector<8x1xf32>
    %126 = arith.mulf %114, %125 : vector<8x1xf32>
    %127 = arith.subf %109, %126 : vector<8x1xf32>
    %128 = vector.broadcast %125 : vector<8x1xf32> to vector<8x256xf32>
    %129 = arith.mulf %110, %128 : vector<8x256xf32>
    %130 = vector.broadcast %127 : vector<8x1xf32> to vector<8x256xf32>
    %131 = arith.addf %129, %130 : vector<8x256xf32>
    %cst_54 = arith.constant 0.000000e+00 : f32
    %132 = vector.broadcast %cst_54 : f32 to vector<8x256xf32>
    %133 = arith.maximumf %131, %132 : vector<8x256xf32>
    %134 = vector.extract_strided_slice %107 {offsets = [0, 256], sizes = [8, 256], strides = [1, 1]} : vector<8x512xf32> to vector<8x256xf32>
    %cst_55 = arith.constant dense<0.000000e+00> : vector<8xf32>
    %135 = vector.multi_reduction <add>, %134, %cst_55 [1] : vector<8x256xf32> to vector<8xf32>
    %136 = vector.shape_cast %135 : vector<8xf32> to vector<8x1xf32>
    %cst_56 = arith.constant 3.906250e-03 : f32
    %137 = vector.broadcast %cst_56 : f32 to vector<8x1xf32>
    %138 = arith.mulf %136, %137 : vector<8x1xf32>
    %139 = arith.mulf %134, %134 : vector<8x256xf32>
    %cst_57 = arith.constant dense<0.000000e+00> : vector<8xf32>
    %140 = vector.multi_reduction <add>, %139, %cst_57 [1] : vector<8x256xf32> to vector<8xf32>
    %141 = vector.shape_cast %140 : vector<8xf32> to vector<8x1xf32>
    %cst_58 = arith.constant 3.906250e-03 : f32
    %142 = vector.broadcast %cst_58 : f32 to vector<8x1xf32>
    %143 = arith.mulf %141, %142 : vector<8x1xf32>
    %144 = arith.mulf %138, %138 : vector<8x1xf32>
    %145 = arith.subf %143, %144 : vector<8x1xf32>
    %cst_59 = arith.constant 9.99999974E-6 : f32
    %146 = vector.broadcast %cst_59 : f32 to vector<8x1xf32>
    %147 = arith.addf %145, %146 : vector<8x1xf32>
    %148 = math.rsqrt %147 : vector<8x1xf32>
    %149 = arith.mulf %108, %148 : vector<8x1xf32>
    %150 = arith.mulf %138, %149 : vector<8x1xf32>
    %151 = arith.subf %109, %150 : vector<8x1xf32>
    %152 = vector.broadcast %149 : vector<8x1xf32> to vector<8x256xf32>
    %153 = arith.mulf %134, %152 : vector<8x256xf32>
    %154 = vector.broadcast %151 : vector<8x1xf32> to vector<8x256xf32>
    %155 = arith.addf %153, %154 : vector<8x256xf32>
    %cst_60 = arith.constant 0.000000e+00 : f32
    %156 = vector.broadcast %cst_60 : f32 to vector<8x256xf32>
    %157 = arith.maximumf %155, %156 : vector<8x256xf32>
    %c17_i32_61 = arith.constant 17 : i32
    %158 = tpu.dynamic_rotate %133 by %c17_i32_61 dim 1 : vector<8x256xf32>, i32 -> vector<8x256xf32>
    %159 = vector.extract_strided_slice %0 {offsets = [0, 0], sizes = [1, 256], strides = [1, 1]} : vector<9x256xf32> to vector<1x256xf32>
    %160 = vector.broadcast %159 : vector<1x256xf32> to vector<8x256xf32>
    %161 = arith.mulf %158, %160 : vector<8x256xf32>
    %162 = arith.truncf %161 : vector<8x256xf32> to vector<8x256xbf16>
    %c0_62 = arith.constant 0 : index
    %c0_63 = arith.constant 0 : index
    %163 = vector.load %arg11[%c0_62, %c0_63] : memref<72x512xbf16, #tpu.memory_space<vmem>>, vector<8x256xbf16>
    tpu.vector_store %arg11[%c0_62, %c0_63], %162 {strides = array<i32>} : memref<72x512xbf16, #tpu.memory_space<vmem>>, vector<8x256xbf16>,
    %c16_i32_64 = arith.constant 16 : i32
    %164 = tpu.dynamic_rotate %133 by %c16_i32_64 dim 1 : vector<8x256xf32>, i32 -> vector<8x256xf32>
    %165 = vector.extract_strided_slice %0 {offsets = [1, 0], sizes = [1, 256], strides = [1, 1]} : vector<9x256xf32> to vector<1x256xf32>
    %166 = vector.broadcast %165 : vector<1x256xf32> to vector<8x256xf32>
    %167 = arith.mulf %164, %166 : vector<8x256xf32>
    %168 = arith.truncf %167 : vector<8x256xf32> to vector<8x256xbf16>
    %c8_65 = arith.constant 8 : index
    %c0_66 = arith.constant 0 : index
    %169 = vector.load %arg11[%c8_65, %c0_66] : memref<72x512xbf16, #tpu.memory_space<vmem>>, vector<8x256xbf16>
    tpu.vector_store %arg11[%c8_65, %c0_66], %168 {strides = array<i32>} : memref<72x512xbf16, #tpu.memory_space<vmem>>, vector<8x256xbf16>,
    %c15_i32_67 = arith.constant 15 : i32
    %170 = tpu.dynamic_rotate %133 by %c15_i32_67 dim 1 : vector<8x256xf32>, i32 -> vector<8x256xf32>
    %171 = vector.extract_strided_slice %0 {offsets = [2, 0], sizes = [1, 256], strides = [1, 1]} : vector<9x256xf32> to vector<1x256xf32>
    %172 = vector.broadcast %171 : vector<1x256xf32> to vector<8x256xf32>
    %173 = arith.mulf %170, %172 : vector<8x256xf32>
    %174 = arith.truncf %173 : vector<8x256xf32> to vector<8x256xbf16>
    %c16_68 = arith.constant 16 : index
    %c0_69 = arith.constant 0 : index
    %175 = vector.load %arg11[%c16_68, %c0_69] : memref<72x512xbf16, #tpu.memory_space<vmem>>, vector<8x256xbf16>
    tpu.vector_store %arg11[%c16_68, %c0_69], %174 {strides = array<i32>} : memref<72x512xbf16, #tpu.memory_space<vmem>>, vector<8x256xbf16>,
    %c1_i32_70 = arith.constant 1 : i32
    %176 = tpu.dynamic_rotate %133 by %c1_i32_70 dim 1 : vector<8x256xf32>, i32 -> vector<8x256xf32>
    %177 = vector.extract_strided_slice %0 {offsets = [3, 0], sizes = [1, 256], strides = [1, 1]} : vector<9x256xf32> to vector<1x256xf32>
    %178 = vector.broadcast %177 : vector<1x256xf32> to vector<8x256xf32>
    %179 = arith.mulf %176, %178 : vector<8x256xf32>
    %180 = arith.truncf %179 : vector<8x256xf32> to vector<8x256xbf16>
    %c24_71 = arith.constant 24 : index
    %c0_72 = arith.constant 0 : index
    %181 = vector.load %arg11[%c24_71, %c0_72] : memref<72x512xbf16, #tpu.memory_space<vmem>>, vector<8x256xbf16>
    tpu.vector_store %arg11[%c24_71, %c0_72], %180 {strides = array<i32>} : memref<72x512xbf16, #tpu.memory_space<vmem>>, vector<8x256xbf16>,
    %182 = arith.truncf %133 : vector<8x256xf32> to vector<8x256xbf16>
    %c32_73 = arith.constant 32 : index
    %c0_74 = arith.constant 0 : index
    %183 = vector.load %arg11[%c32_73, %c0_74] : memref<72x512xbf16, #tpu.memory_space<vmem>>, vector<8x256xbf16>
    tpu.vector_store %arg11[%c32_73, %c0_74], %182 {strides = array<i32>} : memref<72x512xbf16, #tpu.memory_space<vmem>>, vector<8x256xbf16>,
    %c255_i32_75 = arith.constant 255 : i32
    %184 = tpu.dynamic_rotate %133 by %c255_i32_75 dim 1 : vector<8x256xf32>, i32 -> vector<8x256xf32>
    %185 = vector.extract_strided_slice %0 {offsets = [5, 0], sizes = [1, 256], strides = [1, 1]} : vector<9x256xf32> to vector<1x256xf32>
    %186 = vector.broadcast %185 : vector<1x256xf32> to vector<8x256xf32>
    %187 = arith.mulf %184, %186 : vector<8x256xf32>
    %188 = arith.truncf %187 : vector<8x256xf32> to vector<8x256xbf16>
    %c40_76 = arith.constant 40 : index
    %c0_77 = arith.constant 0 : index
    %189 = vector.load %arg11[%c40_76, %c0_77] : memref<72x512xbf16, #tpu.memory_space<vmem>>, vector<8x256xbf16>
    tpu.vector_store %arg11[%c40_76, %c0_77], %188 {strides = array<i32>} : memref<72x512xbf16, #tpu.memory_space<vmem>>, vector<8x256xbf16>,
    %c241_i32_78 = arith.constant 241 : i32
    %190 = tpu.dynamic_rotate %133 by %c241_i32_78 dim 1 : vector<8x256xf32>, i32 -> vector<8x256xf32>
    %191 = vector.extract_strided_slice %0 {offsets = [6, 0], sizes = [1, 256], strides = [1, 1]} : vector<9x256xf32> to vector<1x256xf32>
    %192 = vector.broadcast %191 : vector<1x256xf32> to vector<8x256xf32>
    %193 = arith.mulf %190, %192 : vector<8x256xf32>
    %194 = arith.truncf %193 : vector<8x256xf32> to vector<8x256xbf16>
    %c48_79 = arith.constant 48 : index
    %c0_80 = arith.constant 0 : index
    %195 = vector.load %arg11[%c48_79, %c0_80] : memref<72x512xbf16, #tpu.memory_space<vmem>>, vector<8x256xbf16>
    tpu.vector_store %arg11[%c48_79, %c0_80], %194 {strides = array<i32>} : memref<72x512xbf16, #tpu.memory_space<vmem>>, vector<8x256xbf16>,
    %c240_i32_81 = arith.constant 240 : i32
    %196 = tpu.dynamic_rotate %133 by %c240_i32_81 dim 1 : vector<8x256xf32>, i32 -> vector<8x256xf32>
    %197 = vector.extract_strided_slice %0 {offsets = [7, 0], sizes = [1, 256], strides = [1, 1]} : vector<9x256xf32> to vector<1x256xf32>
    %198 = vector.broadcast %197 : vector<1x256xf32> to vector<8x256xf32>
    %199 = arith.mulf %196, %198 : vector<8x256xf32>
    %200 = arith.truncf %199 : vector<8x256xf32> to vector<8x256xbf16>
    %c56_82 = arith.constant 56 : index
    %c0_83 = arith.constant 0 : index
    %201 = vector.load %arg11[%c56_82, %c0_83] : memref<72x512xbf16, #tpu.memory_space<vmem>>, vector<8x256xbf16>
    tpu.vector_store %arg11[%c56_82, %c0_83], %200 {strides = array<i32>} : memref<72x512xbf16, #tpu.memory_space<vmem>>, vector<8x256xbf16>,
    %c239_i32_84 = arith.constant 239 : i32
    %202 = tpu.dynamic_rotate %133 by %c239_i32_84 dim 1 : vector<8x256xf32>, i32 -> vector<8x256xf32>
    %203 = vector.extract_strided_slice %0 {offsets = [8, 0], sizes = [1, 256], strides = [1, 1]} : vector<9x256xf32> to vector<1x256xf32>
    %204 = vector.broadcast %203 : vector<1x256xf32> to vector<8x256xf32>
    %205 = arith.mulf %202, %204 : vector<8x256xf32>
    %206 = arith.truncf %205 : vector<8x256xf32> to vector<8x256xbf16>
    %c64_85 = arith.constant 64 : index
    %c0_86 = arith.constant 0 : index
    %207 = vector.load %arg11[%c64_85, %c0_86] : memref<72x512xbf16, #tpu.memory_space<vmem>>, vector<8x256xbf16>
    tpu.vector_store %arg11[%c64_85, %c0_86], %206 {strides = array<i32>} : memref<72x512xbf16, #tpu.memory_space<vmem>>, vector<8x256xbf16>,
    %c17_i32_87 = arith.constant 17 : i32
    %208 = tpu.dynamic_rotate %157 by %c17_i32_87 dim 1 : vector<8x256xf32>, i32 -> vector<8x256xf32>
    %209 = vector.extract_strided_slice %0 {offsets = [0, 0], sizes = [1, 256], strides = [1, 1]} : vector<9x256xf32> to vector<1x256xf32>
    %210 = vector.broadcast %209 : vector<1x256xf32> to vector<8x256xf32>
    %211 = arith.mulf %208, %210 : vector<8x256xf32>
    %212 = arith.truncf %211 : vector<8x256xf32> to vector<8x256xbf16>
    %c0_88 = arith.constant 0 : index
    %c256_89 = arith.constant 256 : index
    %213 = vector.load %arg11[%c0_88, %c256_89] : memref<72x512xbf16, #tpu.memory_space<vmem>>, vector<8x256xbf16>
    tpu.vector_store %arg11[%c0_88, %c256_89], %212 {strides = array<i32>} : memref<72x512xbf16, #tpu.memory_space<vmem>>, vector<8x256xbf16>,
    %c16_i32_90 = arith.constant 16 : i32
    %214 = tpu.dynamic_rotate %157 by %c16_i32_90 dim 1 : vector<8x256xf32>, i32 -> vector<8x256xf32>
    %215 = vector.extract_strided_slice %0 {offsets = [1, 0], sizes = [1, 256], strides = [1, 1]} : vector<9x256xf32> to vector<1x256xf32>
    %216 = vector.broadcast %215 : vector<1x256xf32> to vector<8x256xf32>
    %217 = arith.mulf %214, %216 : vector<8x256xf32>
    %218 = arith.truncf %217 : vector<8x256xf32> to vector<8x256xbf16>
    %c8_91 = arith.constant 8 : index
    %c256_92 = arith.constant 256 : index
    %219 = vector.load %arg11[%c8_91, %c256_92] : memref<72x512xbf16, #tpu.memory_space<vmem>>, vector<8x256xbf16>
    tpu.vector_store %arg11[%c8_91, %c256_92], %218 {strides = array<i32>} : memref<72x512xbf16, #tpu.memory_space<vmem>>, vector<8x256xbf16>,
    %c15_i32_93 = arith.constant 15 : i32
    %220 = tpu.dynamic_rotate %157 by %c15_i32_93 dim 1 : vector<8x256xf32>, i32 -> vector<8x256xf32>
    %221 = vector.extract_strided_slice %0 {offsets = [2, 0], sizes = [1, 256], strides = [1, 1]} : vector<9x256xf32> to vector<1x256xf32>
    %222 = vector.broadcast %221 : vector<1x256xf32> to vector<8x256xf32>
    %223 = arith.mulf %220, %222 : vector<8x256xf32>
    %224 = arith.truncf %223 : vector<8x256xf32> to vector<8x256xbf16>
    %c16_94 = arith.constant 16 : index
    %c256_95 = arith.constant 256 : index
    %225 = vector.load %arg11[%c16_94, %c256_95] : memref<72x512xbf16, #tpu.memory_space<vmem>>, vector<8x256xbf16>
    tpu.vector_store %arg11[%c16_94, %c256_95], %224 {strides = array<i32>} : memref<72x512xbf16, #tpu.memory_space<vmem>>, vector<8x256xbf16>,
    %c1_i32_96 = arith.constant 1 : i32
    %226 = tpu.dynamic_rotate %157 by %c1_i32_96 dim 1 : vector<8x256xf32>, i32 -> vector<8x256xf32>
    %227 = vector.extract_strided_slice %0 {offsets = [3, 0], sizes = [1, 256], strides = [1, 1]} : vector<9x256xf32> to vector<1x256xf32>
    %228 = vector.broadcast %227 : vector<1x256xf32> to vector<8x256xf32>
    %229 = arith.mulf %226, %228 : vector<8x256xf32>
    %230 = arith.truncf %229 : vector<8x256xf32> to vector<8x256xbf16>
    %c24_97 = arith.constant 24 : index
    %c256_98 = arith.constant 256 : index
    %231 = vector.load %arg11[%c24_97, %c256_98] : memref<72x512xbf16, #tpu.memory_space<vmem>>, vector<8x256xbf16>
    tpu.vector_store %arg11[%c24_97, %c256_98], %230 {strides = array<i32>} : memref<72x512xbf16, #tpu.memory_space<vmem>>, vector<8x256xbf16>,
    %232 = arith.truncf %157 : vector<8x256xf32> to vector<8x256xbf16>
    %c32_99 = arith.constant 32 : index
    %c256_100 = arith.constant 256 : index
    %233 = vector.load %arg11[%c32_99, %c256_100] : memref<72x512xbf16, #tpu.memory_space<vmem>>, vector<8x256xbf16>
    tpu.vector_store %arg11[%c32_99, %c256_100], %232 {strides = array<i32>} : memref<72x512xbf16, #tpu.memory_space<vmem>>, vector<8x256xbf16>,
    %c255_i32_101 = arith.constant 255 : i32
    %234 = tpu.dynamic_rotate %157 by %c255_i32_101 dim 1 : vector<8x256xf32>, i32 -> vector<8x256xf32>
    %235 = vector.extract_strided_slice %0 {offsets = [5, 0], sizes = [1, 256], strides = [1, 1]} : vector<9x256xf32> to vector<1x256xf32>
    %236 = vector.broadcast %235 : vector<1x256xf32> to vector<8x256xf32>
    %237 = arith.mulf %234, %236 : vector<8x256xf32>
    %238 = arith.truncf %237 : vector<8x256xf32> to vector<8x256xbf16>
    %c40_102 = arith.constant 40 : index
    %c256_103 = arith.constant 256 : index
    %239 = vector.load %arg11[%c40_102, %c256_103] : memref<72x512xbf16, #tpu.memory_space<vmem>>, vector<8x256xbf16>
    tpu.vector_store %arg11[%c40_102, %c256_103], %238 {strides = array<i32>} : memref<72x512xbf16, #tpu.memory_space<vmem>>, vector<8x256xbf16>,
    %c241_i32_104 = arith.constant 241 : i32
    %240 = tpu.dynamic_rotate %157 by %c241_i32_104 dim 1 : vector<8x256xf32>, i32 -> vector<8x256xf32>
    %241 = vector.extract_strided_slice %0 {offsets = [6, 0], sizes = [1, 256], strides = [1, 1]} : vector<9x256xf32> to vector<1x256xf32>
    %242 = vector.broadcast %241 : vector<1x256xf32> to vector<8x256xf32>
    %243 = arith.mulf %240, %242 : vector<8x256xf32>
    %244 = arith.truncf %243 : vector<8x256xf32> to vector<8x256xbf16>
    %c48_105 = arith.constant 48 : index
    %c256_106 = arith.constant 256 : index
    %245 = vector.load %arg11[%c48_105, %c256_106] : memref<72x512xbf16, #tpu.memory_space<vmem>>, vector<8x256xbf16>
    tpu.vector_store %arg11[%c48_105, %c256_106], %244 {strides = array<i32>} : memref<72x512xbf16, #tpu.memory_space<vmem>>, vector<8x256xbf16>,
    %c240_i32_107 = arith.constant 240 : i32
    %246 = tpu.dynamic_rotate %157 by %c240_i32_107 dim 1 : vector<8x256xf32>, i32 -> vector<8x256xf32>
    %247 = vector.extract_strided_slice %0 {offsets = [7, 0], sizes = [1, 256], strides = [1, 1]} : vector<9x256xf32> to vector<1x256xf32>
    %248 = vector.broadcast %247 : vector<1x256xf32> to vector<8x256xf32>
    %249 = arith.mulf %246, %248 : vector<8x256xf32>
    %250 = arith.truncf %249 : vector<8x256xf32> to vector<8x256xbf16>
    %c56_108 = arith.constant 56 : index
    %c256_109 = arith.constant 256 : index
    %251 = vector.load %arg11[%c56_108, %c256_109] : memref<72x512xbf16, #tpu.memory_space<vmem>>, vector<8x256xbf16>
    tpu.vector_store %arg11[%c56_108, %c256_109], %250 {strides = array<i32>} : memref<72x512xbf16, #tpu.memory_space<vmem>>, vector<8x256xbf16>,
    %c239_i32_110 = arith.constant 239 : i32
    %252 = tpu.dynamic_rotate %157 by %c239_i32_110 dim 1 : vector<8x256xf32>, i32 -> vector<8x256xf32>
    %253 = vector.extract_strided_slice %0 {offsets = [8, 0], sizes = [1, 256], strides = [1, 1]} : vector<9x256xf32> to vector<1x256xf32>
    %254 = vector.broadcast %253 : vector<1x256xf32> to vector<8x256xf32>
    %255 = arith.mulf %252, %254 : vector<8x256xf32>
    %256 = arith.truncf %255 : vector<8x256xf32> to vector<8x256xbf16>
    %c64_111 = arith.constant 64 : index
    %c256_112 = arith.constant 256 : index
    %257 = vector.load %arg11[%c64_111, %c256_112] : memref<72x512xbf16, #tpu.memory_space<vmem>>, vector<8x256xbf16>
    tpu.vector_store %arg11[%c64_111, %c256_112], %256 {strides = array<i32>} : memref<72x512xbf16, #tpu.memory_space<vmem>>, vector<8x256xbf16>,
    %c0_113 = arith.constant 0 : index
    %c0_114 = arith.constant 0 : index
    %258 = vector.load %arg6[%c0_113, %c0_114] : memref<8x72xbf16, #tpu.memory_space<vmem>>, vector<8x72xbf16>
    %c0_115 = arith.constant 0 : index
    %c0_116 = arith.constant 0 : index
    %259 = vector.load %arg11[%c0_115, %c0_116] : memref<72x512xbf16, #tpu.memory_space<vmem>>, vector<72x512xbf16>
    %cst_117 = arith.constant dense<0.000000e+00> : vector<8x512xf32>
    %260 = tpu.matmul %258, %259, %cst_117 {dimension_numbers = #tpu.dot_dimension_numbers<[1], [0], [0], [1], [0, 0, 1, 1], [], []>} : vector<8x72xbf16>, vector<72x512xbf16>, vector<8x512xf32> -> vector<8x512xf32>
    %c0_118 = arith.constant 0 : index
    %c0_119 = arith.constant 0 : index
    %261 = vector.load %arg7[%c0_118, %c0_119] : memref<8x1xf32, #tpu.memory_space<vmem>>, vector<8x1xf32>
    %c0_120 = arith.constant 0 : index
    %c0_121 = arith.constant 0 : index
    %262 = vector.load %arg8[%c0_120, %c0_121] : memref<8x1xf32, #tpu.memory_space<vmem>>, vector<8x1xf32>
    %263 = vector.extract_strided_slice %260 {offsets = [0, 0], sizes = [8, 256], strides = [1, 1]} : vector<8x512xf32> to vector<8x256xf32>
    %cst_122 = arith.constant dense<0.000000e+00> : vector<8xf32>
    %264 = vector.multi_reduction <add>, %263, %cst_122 [1] : vector<8x256xf32> to vector<8xf32>
    %265 = vector.shape_cast %264 : vector<8xf32> to vector<8x1xf32>
    %cst_123 = arith.constant 3.906250e-03 : f32
    %266 = vector.broadcast %cst_123 : f32 to vector<8x1xf32>
    %267 = arith.mulf %265, %266 : vector<8x1xf32>
    %268 = arith.mulf %263, %263 : vector<8x256xf32>
    %cst_124 = arith.constant dense<0.000000e+00> : vector<8xf32>
    %269 = vector.multi_reduction <add>, %268, %cst_124 [1] : vector<8x256xf32> to vector<8xf32>
    %270 = vector.shape_cast %269 : vector<8xf32> to vector<8x1xf32>
    %cst_125 = arith.constant 3.906250e-03 : f32
    %271 = vector.broadcast %cst_125 : f32 to vector<8x1xf32>
    %272 = arith.mulf %270, %271 : vector<8x1xf32>
    %273 = arith.mulf %267, %267 : vector<8x1xf32>
    %274 = arith.subf %272, %273 : vector<8x1xf32>
    %cst_126 = arith.constant 9.99999974E-6 : f32
    %275 = vector.broadcast %cst_126 : f32 to vector<8x1xf32>
    %276 = arith.addf %274, %275 : vector<8x1xf32>
    %277 = math.rsqrt %276 : vector<8x1xf32>
    %278 = arith.mulf %261, %277 : vector<8x1xf32>
    %279 = arith.mulf %267, %278 : vector<8x1xf32>
    %280 = arith.subf %262, %279 : vector<8x1xf32>
    %281 = vector.broadcast %278 : vector<8x1xf32> to vector<8x256xf32>
    %282 = arith.mulf %263, %281 : vector<8x256xf32>
    %283 = vector.broadcast %280 : vector<8x1xf32> to vector<8x256xf32>
    %284 = arith.addf %282, %283 : vector<8x256xf32>
    %cst_127 = arith.constant 0.000000e+00 : f32
    %285 = vector.broadcast %cst_127 : f32 to vector<8x256xf32>
    %286 = arith.maximumf %284, %285 : vector<8x256xf32>
    %287 = vector.extract_strided_slice %260 {offsets = [0, 256], sizes = [8, 256], strides = [1, 1]} : vector<8x512xf32> to vector<8x256xf32>
    %cst_128 = arith.constant dense<0.000000e+00> : vector<8xf32>
    %288 = vector.multi_reduction <add>, %287, %cst_128 [1] : vector<8x256xf32> to vector<8xf32>
    %289 = vector.shape_cast %288 : vector<8xf32> to vector<8x1xf32>
    %cst_129 = arith.constant 3.906250e-03 : f32
    %290 = vector.broadcast %cst_129 : f32 to vector<8x1xf32>
    %291 = arith.mulf %289, %290 : vector<8x1xf32>
    %292 = arith.mulf %287, %287 : vector<8x256xf32>
    %cst_130 = arith.constant dense<0.000000e+00> : vector<8xf32>
    %293 = vector.multi_reduction <add>, %292, %cst_130 [1] : vector<8x256xf32> to vector<8xf32>
    %294 = vector.shape_cast %293 : vector<8xf32> to vector<8x1xf32>
    %cst_131 = arith.constant 3.906250e-03 : f32
    %295 = vector.broadcast %cst_131 : f32 to vector<8x1xf32>
    %296 = arith.mulf %294, %295 : vector<8x1xf32>
    %297 = arith.mulf %291, %291 : vector<8x1xf32>
    %298 = arith.subf %296, %297 : vector<8x1xf32>
    %cst_132 = arith.constant 9.99999974E-6 : f32
    %299 = vector.broadcast %cst_132 : f32 to vector<8x1xf32>
    %300 = arith.addf %298, %299 : vector<8x1xf32>
    %301 = math.rsqrt %300 : vector<8x1xf32>
    %302 = arith.mulf %261, %301 : vector<8x1xf32>
    %303 = arith.mulf %291, %302 : vector<8x1xf32>
    %304 = arith.subf %262, %303 : vector<8x1xf32>
    %305 = vector.broadcast %302 : vector<8x1xf32> to vector<8x256xf32>
    %306 = arith.mulf %287, %305 : vector<8x256xf32>
    %307 = vector.broadcast %304 : vector<8x1xf32> to vector<8x256xf32>
    %308 = arith.addf %306, %307 : vector<8x256xf32>
    %cst_133 = arith.constant 0.000000e+00 : f32
    %309 = vector.broadcast %cst_133 : f32 to vector<8x256xf32>
    %310 = arith.maximumf %308, %309 : vector<8x256xf32>
    %c0_134 = arith.constant 0 : index
    %c0_135 = arith.constant 0 : index
    %c0_136 = arith.constant 0 : index
    %311 = vector.load %arg9[%c0_134, %c0_135, %c0_136] : memref<2x8x256xf32, #tpu.memory_space<vmem>>, vector<1x8x256xf32>
    %312 = vector.shape_cast %311 : vector<1x8x256xf32> to vector<8x256xf32>
    %313 = vector.shape_cast %286 : vector<8x256xf32> to vector<1x8x256xf32>
    tpu.vector_store %arg9[%c0_134, %c0_135, %c0_136], %313 {strides = array<i32>} : memref<2x8x256xf32, #tpu.memory_space<vmem>>, vector<1x8x256xf32>,
    %c1_137 = arith.constant 1 : index
    %c0_138 = arith.constant 0 : index
    %c0_139 = arith.constant 0 : index
    %314 = vector.load %arg9[%c1_137, %c0_138, %c0_139] : memref<2x8x256xf32, #tpu.memory_space<vmem>>, vector<1x8x256xf32>
    %315 = vector.shape_cast %314 : vector<1x8x256xf32> to vector<8x256xf32>
    %316 = vector.shape_cast %310 : vector<8x256xf32> to vector<1x8x256xf32>
    tpu.vector_store %arg9[%c1_137, %c0_138, %c0_139], %316 {strides = array<i32>} : memref<2x8x256xf32, #tpu.memory_space<vmem>>, vector<1x8x256xf32>,
    return
  }
  func.func @transform_0(%arg0: i32) -> (i32, i32, i32) {
    %c0_i32 = arith.constant 0 : i32
    %c0_i32_0 = arith.constant 0 : i32
    %c0_i32_1 = arith.constant 0 : i32
    return %arg0, %c0_i32, %c0_i32_0 : i32, i32, i32
  }
  func.func @transform_1(%arg0: i32) -> (i32, i32) {
    %c0_i32 = arith.constant 0 : i32
    %c0_i32_0 = arith.constant 0 : i32
    %c0_i32_1 = arith.constant 0 : i32
    return %c0_i32, %c0_i32_0 : i32, i32
  }
  func.func @transform_2(%arg0: i32) -> (i32, i32) {
    %c0_i32 = arith.constant 0 : i32
    %c0_i32_0 = arith.constant 0 : i32
    %c0_i32_1 = arith.constant 0 : i32
    return %c0_i32, %c0_i32_0 : i32, i32
  }
  func.func @transform_3(%arg0: i32) -> (i32, i32) {
    %c0_i32 = arith.constant 0 : i32
    %c0_i32_0 = arith.constant 0 : i32
    %c0_i32_1 = arith.constant 0 : i32
    return %c0_i32, %c0_i32_0 : i32, i32
  }
  func.func @transform_4(%arg0: i32) -> (i32, i32) {
    %c0_i32 = arith.constant 0 : i32
    %c0_i32_0 = arith.constant 0 : i32
    %c0_i32_1 = arith.constant 0 : i32
    return %c0_i32, %c0_i32_0 : i32, i32
  }
  func.func @transform_5(%arg0: i32) -> (i32, i32) {
    %c0_i32 = arith.constant 0 : i32
    %c0_i32_0 = arith.constant 0 : i32
    %c0_i32_1 = arith.constant 0 : i32
    return %c0_i32, %c0_i32_0 : i32, i32
  }
  func.func @transform_6(%arg0: i32) -> (i32, i32) {
    %c0_i32 = arith.constant 0 : i32
    %c0_i32_0 = arith.constant 0 : i32
    %c0_i32_1 = arith.constant 0 : i32
    return %c0_i32, %c0_i32_0 : i32, i32
  }
  func.func @transform_7(%arg0: i32) -> (i32, i32) {
    %c0_i32 = arith.constant 0 : i32
    %c0_i32_0 = arith.constant 0 : i32
    %c0_i32_1 = arith.constant 0 : i32
    return %c0_i32, %c0_i32_0 : i32, i32
  }
  func.func @transform_8(%arg0: i32) -> (i32, i32, i32) {
    %c0_i32 = arith.constant 0 : i32
    %c0_i32_0 = arith.constant 0 : i32
    %c0_i32_1 = arith.constant 0 : i32
    return %arg0, %c0_i32, %c0_i32_0 : i32, i32, i32
  }
}

</mosaic_0001>

<llo_original>
// kernel: tpu_custom_call.1
$region0: #{tpu_custom_call.1}
  #allocation0 [shape = 'u32[]', space=smem, size = 0x4, offset = 0x4, fixed_abs, tag = 'smem constant byte address 0x4 - core index']
  #allocation1 [shape = 'u32[72,128]{1,0:T(1,128)}', space=vmem, size = 0x9000, scoped, tag = 'internal scratch']
  #allocation2 [shape = 'bf16[72,512]{1,0:T(8,128)(2,1)}', space=vmem, size = 0x12000, scoped, tag = 'scratch operand']
  #allocation3 [shape = 'bf16[72,512]{1,0:T(8,128)(2,1)}', space=vmem, size = 0x12000, scoped, tag = 'scratch operand']
  %s0 = inlined_call_operand.hbm [shape: f32[2,8,256], index: 0, kind: input, shape index: {}]
  %s1 = inlined_call_operand.hbm [shape: f32[9,256], index: 1, kind: input, shape index: {}]
  %s2 = inlined_call_operand.vmem [shape: bf16[8,72], index: 2, kind: input, shape index: {}]
  %s3 = inlined_call_operand.vmem [shape: f32[8,1], index: 3, kind: input, shape index: {}]
  %s4 = inlined_call_operand.vmem [shape: f32[8,1], index: 4, kind: input, shape index: {}]
  %s5 = inlined_call_operand.vmem [shape: bf16[8,72], index: 5, kind: input, shape index: {}]
  %s6 = inlined_call_operand.vmem [shape: f32[8,1], index: 6, kind: input, shape index: {}]
  %s7 = inlined_call_operand.vmem [shape: f32[8,1], index: 7, kind: input, shape index: {}]
  %s8 = inlined_call_operand.hbm [shape: f32[2,8,256], index: 8, kind: output, shape index: {}]
  %s9 = sld [smem:[#allocation0]]
  $region50: #{tpu_custom_call.1} parent=0
    _
  %s11 = ssub.s32 1, %s9
  %s12 = scalar_select 0, %s11, %s9
  $region1: #{tpu_custom_call.1} parent=0
    #allocation4 [shape = 'u8[16384]{0}', space=vmem, size = 0x4000, scoped, tag = 'input window, operand 0, single buffered']
    #allocation5 [shape = 's32[1]{0}', space=sflag, size = 0x4, scoped, tag = 'scoped memory for tpu_custom_call.1']
    #allocation6 [shape = 's32[1]{0}', space=sflag, size = 0x4, scoped, tag = 'scoped memory for tpu_custom_call.1']
    #allocation7 [shape = 'u8[16384]{0}', space=vmem, size = 0x4000, scoped, tag = 'input window, operand 1, single buffered']
    #allocation8 [shape = 's32[1]{0}', space=sflag, size = 0x4, scoped, tag = 'scoped memory for tpu_custom_call.1']
    #allocation9 [shape = 'u8[16384]{0}', space=vmem, size = 0x4000, scoped, tag = 'output window, operand 0, single buffered']
    %13 = vsyncpa [#allocation5], 0
    %14 = vsyncpa [#allocation8], 0
    %15 = vsyncpa [#allocation6], 0
    // Predicated region
    $region2: #{tpu_custom_call.1} parent=1 // pred_check
      _
    $region3: #{tpu_custom_call.1} parent=1 // pred_check_branch
      %17 = sbr.rel (0) target = $region5
    $region4: #{tpu_custom_call.1} parent=1 // pred_region
      %19 = vsyncadd [#allocation5], 0
      %s20 = sshll.u32 %s0, 4
      %s21 = int_to_ptr.hbm [resolvable:$true] %s20
      %s22 = sshll.u32 [#allocation4], 4
      %s23 = int_to_ptr.vmem [resolvable:$true] %s22
      %28 = dma.hbm_to_vmem [thread:$0]  %s21, 512, %s23, [#allocation5], 256, 256, 16
    $region5: #{tpu_custom_call.1} parent=1 // pred_fallthru
      _
    // Predicated region
    $region6: #{tpu_custom_call.1} parent=1 // pred_check
      _
    $region7: #{tpu_custom_call.1} parent=1 // pred_check_branch
      %30 = sbr.rel (0) target = $region9
    $region8: #{tpu_custom_call.1} parent=1 // pred_region
      %32 = vsyncadd [#allocation8], 0
      %s33 = sshll.u32 %s1, 4
      %s34 = int_to_ptr.hbm [resolvable:$true] %s33
      %s35 = sshll.u32 [#allocation7], 4
      %s36 = int_to_ptr.vmem [resolvable:$true] %s35
      %41 = dma.hbm_to_vmem [thread:$0]  %s34, 512, %s36, [#allocation8], 256, 256, 16
    $region9: #{tpu_custom_call.1} parent=1 // pred_fallthru
      _
    // Predicated region
    $region10: #{tpu_custom_call.1} parent=1 // pred_check
      _
    $region11: #{tpu_custom_call.1} parent=1 // pred_check_branch
      %43 = sbr.rel (0) target = $region13
    $region12: #{tpu_custom_call.1} parent=1 // pred_region
      _
    $region13: #{tpu_custom_call.1} parent=1 // pred_fallthru
      _
    // Predicated region
    $region14: #{tpu_custom_call.1} parent=1 // pred_check
      _
    $region15: #{tpu_custom_call.1} parent=1 // pred_check_branch
      %45 = sbr.rel (0) target = $region17
    $region16: #{tpu_custom_call.1} parent=1 // pred_region
      _
    $region17: #{tpu_custom_call.1} parent=1 // pred_fallthru
      _
    // Predicated region
    $region18: #{tpu_custom_call.1} parent=1 // pred_check
      _
    $region19: #{tpu_custom_call.1} parent=1 // pred_check_branch
      %47 = sbr.rel (0) target = $region21
    $region20: #{tpu_custom_call.1} parent=1 // pred_region
      _
    $region21: #{tpu_custom_call.1} parent=1 // pred_fallthru
      _
    // Predicated region
    $region22: #{tpu_custom_call.1} parent=1 // pred_check
      _
    $region23: #{tpu_custom_call.1} parent=1 // pred_check_branch
      %49 = sbr.rel (0) target = $region25
    $region24: #{tpu_custom_call.1} parent=1 // pred_region
      _
    $region25: #{tpu_custom_call.1} parent=1 // pred_fallthru
      _
    // Predicated region
    $region26: #{tpu_custom_call.1} parent=1 // pred_check
      _
    $region27: #{tpu_custom_call.1} parent=1 // pred_check_branch
      %51 = sbr.rel (0) target = $region29
    $region28: #{tpu_custom_call.1} parent=1 // pred_region
      _
    $region29: #{tpu_custom_call.1} parent=1 // pred_fallthru
      _
    // Predicated region
    $region30: #{tpu_custom_call.1} parent=1 // pred_check
      _
    $region31: #{tpu_custom_call.1} parent=1 // pred_check_branch
      %53 = sbr.rel (0) target = $region33
    $region32: #{tpu_custom_call.1} parent=1 // pred_region
      _
    $region33: #{tpu_custom_call.1} parent=1 // pred_fallthru
      _
    // Predicated region
    $region34: #{tpu_custom_call.1} parent=1 // pred_check
      _
    $region35: #{tpu_custom_call.1} parent=1 // pred_check_branch
      %55 = sbr.rel (0) target = $region37
    $region36: #{tpu_custom_call.1} parent=1 // pred_region
      %57 = dma.done [#allocation5], 512
    $region37: #{tpu_custom_call.1} parent=1 // pred_fallthru
      _
    // Predicated region
    $region38: #{tpu_custom_call.1} parent=1 // pred_check
      _
    $region39: #{tpu_custom_call.1} parent=1 // pred_check_branch
      %59 = sbr.rel (0) target = $region41
    $region40: #{tpu_custom_call.1} parent=1 // pred_region
      %61 = dma.done [#allocation8], 512
    $region41: #{tpu_custom_call.1} parent=1 // pred_fallthru
      _
    %v63 = vld [vmem:[#allocation7] sm:$0xff]
    %v64 = vld [vmem:[#allocation7 + $0x8] sm:$0xff]
    %v65 = vld [vmem:[#allocation7 + $0x10] sm:$0x1]
    %v66 = vld [vmem:[#allocation7 + $0x18] sm:$0x1]
    %v67 = vld [vmem:[#allocation4] sm:$0xff]
    %v68 = vld [vmem:[#allocation4 + $0x8] sm:$0xff]
    %69 = vrot.lane.b32.xlu0 %v67, 17
    %v70 = vpop.permute.xlu0 %69
    %71 = vrot.lane.b32.xlu0 %v68, 17
    %v72 = vpop.permute.xlu0 %71
    %v73 = vlaneseq
    %v74 = vand.u32 %v73, 127
    %vm75 = vcmp.lt.s32.totalorder %v74, 17
    %v76 = vsel %vm75, %v70, %v72
    %v77 = vsel %vm75, %v72, %v70
    %v78 = vperm.slane %v63, 0
    %v79 = vperm.slane %v64, 0
    %v80 = vmul.f32 %v77, %v78
    %v81 = vmul.f32 %v76, %v79
    %v82 = vpack.c.bf16 %v81, %v80
    %83 = vst [vmem:[#allocation2] sm:$0xff] %v82
    %84 = vrot.lane.b32.xlu0 %v67, 16
    %v85 = vpop.permute.xlu0 %84
    %86 = vrot.lane.b32.xlu0 %v68, 16
    %v87 = vpop.permute.xlu0 %86
    %vm88 = vcmp.lt.s32.totalorder %v74, 16
    %v89 = vsel %vm88, %v85, %v87
    %v90 = vsel %vm88, %v87, %v85
    %v91 = vperm.slane %v63, 1
    %v92 = vperm.slane %v64, 1
    %v93 = vmul.f32 %v90, %v91
    %v94 = vmul.f32 %v89, %v92
    %v95 = vpack.c.bf16 %v94, %v93
    %96 = vst [vmem:[#allocation2 + $0x10] sm:$0xff] %v95
    %97 = vrot.lane.b32.xlu0 %v67, 15
    %v98 = vpop.permute.xlu0 %97
    %99 = vrot.lane.b32.xlu0 %v68, 15
    %v100 = vpop.permute.xlu0 %99
    %vm101 = vcmp.lt.s32.totalorder %v74, 15
    %v102 = vsel %vm101, %v98, %v100
    %v103 = vsel %vm101, %v100, %v98
    %v104 = vperm.slane %v63, 2
    %v105 = vperm.slane %v64, 2
    %v106 = vmul.f32 %v103, %v104
    %v107 = vmul.f32 %v102, %v105
    %v108 = vpack.c.bf16 %v107, %v106
    %109 = vst [vmem:[#allocation2 + $0x20] sm:$0xff] %v108
    %110 = vrot.lane.b32.xlu0 %v67, 1
    %v111 = vpop.permute.xlu0 %110
    %112 = vrot.lane.b32.xlu0 %v68, 1
    %v113 = vpop.permute.xlu0 %112
    %vm114 = vcmp.lt.s32.totalorder %v74, 1
    %v115 = vsel %vm114, %v111, %v113
    %v116 = vsel %vm114, %v113, %v111
    %v117 = vperm.slane %v63, 3
    %v118 = vperm.slane %v64, 3
    %v119 = vmul.f32 %v116, %v117
    %v120 = vmul.f32 %v115, %v118
    %v121 = vpack.c.bf16 %v120, %v119
    %122 = vst [vmem:[#allocation2 + $0x30] sm:$0xff] %v121
    %v123 = vpack.c.bf16 %v68, %v67
    %124 = vst [vmem:[#allocation2 + $0x40] sm:$0xff] %v123
    %125 = vrot.lane.b32.xlu0 %v67, 127
    %v126 = vpop.permute.xlu0 %125
    %127 = vrot.lane.b32.xlu0 %v68, 127
    %v128 = vpop.permute.xlu0 %127
    %vm129 = vcmp.lt.s32.totalorder %v74, 127
    %v130 = vsel %vm129, %v126, %v128
    %v131 = vsel %vm129, %v128, %v126
    %v132 = vperm.slane %v63, 5
    %v133 = vperm.slane %v64, 5
    %v134 = vmul.f32 %v130, %v132
    %v135 = vmul.f32 %v131, %v133
    %v136 = vpack.c.bf16 %v135, %v134
    %137 = vst [vmem:[#allocation2 + $0x50] sm:$0xff] %v136
    %138 = vrot.lane.b32.xlu0 %v67, 113
    %v139 = vpop.permute.xlu0 %138
    %140 = vrot.lane.b32.xlu0 %v68, 113
    %v141 = vpop.permute.xlu0 %140
    %vm142 = vcmp.lt.s32.totalorder %v74, 113
    %v143 = vsel %vm142, %v139, %v141
    %v144 = vsel %vm142, %v141, %v139
    %v145 = vperm.slane %v63, 6
    %v146 = vperm.slane %v64, 6
    %v147 = vmul.f32 %v143, %v145
    %v148 = vmul.f32 %v144, %v146
    %v149 = vpack.c.bf16 %v148, %v147
    %150 = vst [vmem:[#allocation2 + $0x60] sm:$0xff] %v149
    %151 = vrot.lane.b32.xlu0 %v67, 112
    %v152 = vpop.permute.xlu0 %151
    %153 = vrot.lane.b32.xlu0 %v68, 112
    %v154 = vpop.permute.xlu0 %153
    %vm155 = vcmp.lt.s32.totalorder %v74, 112
    %v156 = vsel %vm155, %v152, %v154
    %v157 = vsel %vm155, %v154, %v152
    %v158 = vperm.slane %v63, 7
    %v159 = vperm.slane %v64, 7
    %v160 = vmul.f32 %v156, %v158
    %v161 = vmul.f32 %v157, %v159
    %v162 = vpack.c.bf16 %v161, %v160
    %163 = vst [vmem:[#allocation2 + $0x70] sm:$0xff] %v162
    %164 = vrot.lane.b32.xlu0 %v67, 111
    %v165 = vpop.permute.xlu0 %164
    %166 = vrot.lane.b32.xlu0 %v68, 111
    %v167 = vpop.permute.xlu0 %166
    %vm168 = vcmp.lt.s32.totalorder %v74, 111
    %v169 = vsel %vm168, %v165, %v167
    %v170 = vsel %vm168, %v167, %v165
    %v171 = vperm.slane %v65, 0
    %v172 = vperm.slane %v66, 0
    %v173 = vmul.f32 %v169, %v171
    %v174 = vmul.f32 %v170, %v172
    %v175 = vpack.c.bf16 %v174, %v173
    %176 = vst [vmem:[#allocation2 + $0x80] sm:$0xff] %v175
    %s177 = scalar_lea.vmem [#allocation4], 16
    %v178 = vld [vmem:[%s177] sm:$0xff]
    %v179 = vld [vmem:[%s177 + $0x8] sm:$0xff]
    %180 = vrot.lane.b32.xlu0 %v178, 17
    %v181 = vpop.permute.xlu0 %180
    %182 = vrot.lane.b32.xlu0 %v179, 17
    %v183 = vpop.permute.xlu0 %182
    %v184 = vsel %vm75, %v181, %v183
    %v185 = vsel %vm75, %v183, %v181
    %v186 = vmul.f32 %v185, %v78
    %v187 = vmul.f32 %v184, %v79
    %v188 = vpack.c.bf16 %v187, %v186
    %189 = vst [vmem:[#allocation2 + $0x8] sm:$0xff] %v188
    %190 = vrot.lane.b32.xlu0 %v178, 16
    %v191 = vpop.permute.xlu0 %190
    %192 = vrot.lane.b32.xlu0 %v179, 16
    %v193 = vpop.permute.xlu0 %192
    %v194 = vsel %vm88, %v191, %v193
    %v195 = vsel %vm88, %v193, %v191
    %v196 = vmul.f32 %v195, %v91
    %v197 = vmul.f32 %v194, %v92
    %v198 = vpack.c.bf16 %v197, %v196
    %199 = vst [vmem:[#allocation2 + $0x18] sm:$0xff] %v198
    %200 = vrot.lane.b32.xlu0 %v178, 15
    %v201 = vpop.permute.xlu0 %200
    %202 = vrot.lane.b32.xlu0 %v179, 15
    %v203 = vpop.permute.xlu0 %202
    %v204 = vsel %vm101, %v201, %v203
    %v205 = vsel %vm101, %v203, %v201
    %v206 = vmul.f32 %v205, %v104
    %v207 = vmul.f32 %v204, %v105
    %v208 = vpack.c.bf16 %v207, %v206
    %209 = vst [vmem:[#allocation2 + $0x28] sm:$0xff] %v208
    %210 = vrot.lane.b32.xlu0 %v178, 1
    %v211 = vpop.permute.xlu0 %210
    %212 = vrot.lane.b32.xlu0 %v179, 1
    %v213 = vpop.permute.xlu0 %212
    %v214 = vsel %vm114, %v211, %v213
    %v215 = vsel %vm114, %v213, %v211
    %v216 = vmul.f32 %v215, %v117
    %v217 = vmul.f32 %v214, %v118
    %v218 = vpack.c.bf16 %v217, %v216
    %219 = vst [vmem:[#allocation2 + $0x38] sm:$0xff] %v218
    %v220 = vpack.c.bf16 %v179, %v178
    %221 = vst [vmem:[#allocation2 + $0x48] sm:$0xff] %v220
    %222 = vrot.lane.b32.xlu0 %v178, 127
    %v223 = vpop.permute.xlu0 %222
    %224 = vrot.lane.b32.xlu0 %v179, 127
    %v225 = vpop.permute.xlu0 %224
    %v226 = vsel %vm129, %v223, %v225
    %v227 = vsel %vm129, %v225, %v223
    %v228 = vmul.f32 %v226, %v132
    %v229 = vmul.f32 %v227, %v133
    %v230 = vpack.c.bf16 %v229, %v228
    %231 = vst [vmem:[#allocation2 + $0x58] sm:$0xff] %v230
    %232 = vrot.lane.b32.xlu0 %v178, 113
    %v233 = vpop.permute.xlu0 %232
    %234 = vrot.lane.b32.xlu0 %v179, 113
    %v235 = vpop.permute.xlu0 %234
    %v236 = vsel %vm142, %v233, %v235
    %v237 = vsel %vm142, %v235, %v233
    %v238 = vmul.f32 %v236, %v145
    %v239 = vmul.f32 %v237, %v146
    %v240 = vpack.c.bf16 %v239, %v238
    %241 = vst [vmem:[#allocation2 + $0x68] sm:$0xff] %v240
    %242 = vrot.lane.b32.xlu0 %v178, 112
    %v243 = vpop.permute.xlu0 %242
    %244 = vrot.lane.b32.xlu0 %v179, 112
    %v245 = vpop.permute.xlu0 %244
    %v246 = vsel %vm155, %v243, %v245
    %v247 = vsel %vm155, %v245, %v243
    %v248 = vmul.f32 %v246, %v158
    %v249 = vmul.f32 %v247, %v159
    %v250 = vpack.c.bf16 %v249, %v248
    %251 = vst [vmem:[#allocation2 + $0x78] sm:$0xff] %v250
    %252 = vrot.lane.b32.xlu0 %v178, 111
    %v253 = vpop.permute.xlu0 %252
    %254 = vrot.lane.b32.xlu0 %v179, 111
    %v255 = vpop.permute.xlu0 %254
    %v256 = vsel %vm168, %v253, %v255
    %v257 = vsel %vm168, %v255, %v253
    %v258 = vmul.f32 %v256, %v171
    %v259 = vmul.f32 %v257, %v172
    %v260 = vpack.c.bf16 %v259, %v258
    %261 = vst [vmem:[#allocation2 + $0x88] sm:$0xff] %v260
    %v262 = vld [vmem:[%s2] sm:$0xf]
    %v263 = vld [vmem:[#allocation2] sm:$0xff]
    %v264 = vld [vmem:[#allocation2 + $0x8] sm:$0xff]
    %v265 = vld [vmem:[#allocation2 + $0x10] sm:$0xff]
    %v266 = vld [vmem:[#allocation2 + $0x18] sm:$0xff]
    %v267 = vld [vmem:[#allocation2 + $0x20] sm:$0xff]
    %v268 = vld [vmem:[#allocation2 + $0x28] sm:$0xff]
    %v269 = vld [vmem:[#allocation2 + $0x30] sm:$0xff]
    %v270 = vld [vmem:[#allocation2 + $0x38] sm:$0xff]
    %v271 = vld [vmem:[#allocation2 + $0x40] sm:$0xff]
    %v272 = vld [vmem:[#allocation2 + $0x48] sm:$0xff]
    %v273 = vld [vmem:[#allocation2 + $0x50] sm:$0xff]
    %v274 = vld [vmem:[#allocation2 + $0x58] sm:$0xff]
    %v275 = vld [vmem:[#allocation2 + $0x60] sm:$0xff]
    %v276 = vld [vmem:[#allocation2 + $0x68] sm:$0xff]
    %v277 = vld [vmem:[#allocation2 + $0x70] sm:$0xff]
    %v278 = vld [vmem:[#allocation2 + $0x78] sm:$0xff]
    %v279 = vld [vmem:[#allocation2 + $0x80] sm:$0xff]
    %v280 = vld [vmem:[#allocation2 + $0x88] sm:$0xff]
    %v299 = vunpack.c.l.b16 %v263
    %v300 = vunpack.c.h.b16 %v263
    %v301 = vunpack.c.l.b16 %v264
    %v302 = vunpack.c.h.b16 %v264
    %v303 = vunpack.c.l.b16 %v265
    %v304 = vunpack.c.h.b16 %v265
    %v305 = vunpack.c.l.b16 %v266
    %v306 = vunpack.c.h.b16 %v266
    %v307 = vunpack.c.l.b16 %v267
    %v308 = vunpack.c.h.b16 %v267
    %v309 = vunpack.c.l.b16 %v268
    %v310 = vunpack.c.h.b16 %v268
    %v311 = vunpack.c.l.b16 %v269
    %v312 = vunpack.c.h.b16 %v269
    %v313 = vunpack.c.l.b16 %v270
    %v314 = vunpack.c.h.b16 %v270
    %v315 = vunpack.c.l.b16 %v271
    %v316 = vunpack.c.h.b16 %v271
    %v317 = vunpack.c.l.b16 %v272
    %v318 = vunpack.c.h.b16 %v272
    %v319 = vunpack.c.l.b16 %v273
    %v320 = vunpack.c.h.b16 %v273
    %v321 = vunpack.c.l.b16 %v274
    %v322 = vunpack.c.h.b16 %v274
    %v323 = vunpack.c.l.b16 %v275
    %v324 = vunpack.c.h.b16 %v275
    %v325 = vunpack.c.l.b16 %v276
    %v326 = vunpack.c.h.b16 %v276
    %v327 = vunpack.c.l.b16 %v277
    %v328 = vunpack.c.h.b16 %v277
    %v329 = vunpack.c.l.b16 %v278
    %v330 = vunpack.c.h.b16 %v278
    %v331 = vunpack.c.l.b16 %v279
    %v332 = vunpack.c.h.b16 %v279
    %v333 = vunpack.c.l.b16 %v280
    %v334 = vunpack.c.h.b16 %v280
    %v335 = vpack.c.b16 %v303, %v299
    %v336 = vpack.c.b16 %v304, %v300
    %v337 = vpack.c.b16 %v305, %v301
    %v338 = vpack.c.b16 %v306, %v302
    %v339 = vpack.c.b16 %v311, %v307
    %v340 = vpack.c.b16 %v312, %v308
    %v341 = vpack.c.b16 %v313, %v309
    %v342 = vpack.c.b16 %v314, %v310
    %v343 = vpack.c.b16 %v319, %v315
    %v344 = vpack.c.b16 %v320, %v316
    %v345 = vpack.c.b16 %v321, %v317
    %v346 = vpack.c.b16 %v322, %v318
    %v347 = vpack.c.b16 %v327, %v323
    %v348 = vpack.c.b16 %v328, %v324
    %v349 = vpack.c.b16 %v329, %v325
    %v350 = vpack.c.b16 %v330, %v326
    %v351 = vpack.c.b16 %v331, %v331
    %v352 = vpack.c.b16 %v332, %v332
    %v353 = vpack.c.b16 %v333, %v333
    %v354 = vpack.c.b16 %v334, %v334
    %vm371 = vcmask 588800
    %v373 = vsel %vm371, %v262, 0
    %vm375 = vcmask 1043456
    %v377 = vsel %vm375, %v351, 0
    %v380 = vsel %vm375, %v352, 0
    %v383 = vsel %vm375, %v353, 0
    %v386 = vsel %vm375, %v354, 0
    %388 = vmatpush.bf16.msra.mxu0 0
    %389 = vmatpush.bf16.msra.mxu0 0
    %390 = vmatpush.bf16.msra.mxu0 0
    %391 = vmatpush.bf16.msra.mxu0 %v377
    %392 = vmatpush.bf16.msra.mxu0 %v347
    %393 = vmatpush.bf16.msra.mxu0 %v343
    %394 = vmatpush.bf16.msra.mxu0 %v339
    %395 = vmatpush.bf16.msra.mxu0 %v335
    %396 = vmatmul.bf16.gmra.mxu0 %v373
    %v397 = vpop.f32.mrf.mxu0
    %v398 = vadd.f32 0.0, %v397
    %v399 = vpop.f32.mrf.mxu0
    %400 = vdwg.mxu0
    %401 = vmatpush.bf16.msra.mxu0 0
    %402 = vmatpush.bf16.msra.mxu0 0
    %403 = vmatpush.bf16.msra.mxu0 0
    %404 = vmatpush.bf16.msra.mxu0 %v380
    %405 = vmatpush.bf16.msra.mxu0 %v348
    %406 = vmatpush.bf16.msra.mxu0 %v344
    %407 = vmatpush.bf16.msra.mxu0 %v340
    %408 = vmatpush.bf16.msra.mxu0 %v336
    %409 = vmatmul.bf16.gmra.mxu0 %v373
    %v410 = vpop.f32.mrf.mxu0
    %v411 = vadd.f32 0.0, %v410
    %v412 = vpop.f32.mrf.mxu0
    %413 = vdwg.mxu0
    %414 = vmatpush.bf16.msra.mxu0 0
    %415 = vmatpush.bf16.msra.mxu0 0
    %416 = vmatpush.bf16.msra.mxu0 0
    %417 = vmatpush.bf16.msra.mxu0 %v383
    %418 = vmatpush.bf16.msra.mxu0 %v349
    %419 = vmatpush.bf16.msra.mxu0 %v345
    %420 = vmatpush.bf16.msra.mxu0 %v341
    %421 = vmatpush.bf16.msra.mxu0 %v337
    %422 = vmatmul.bf16.gmra.mxu0 %v373
    %v423 = vpop.f32.mrf.mxu0
    %v424 = vadd.f32 0.0, %v423
    %v425 = vpop.f32.mrf.mxu0
    %426 = vdwg.mxu0
    %427 = vmatpush.bf16.msra.mxu0 0
    %428 = vmatpush.bf16.msra.mxu0 0
    %429 = vmatpush.bf16.msra.mxu0 0
    %430 = vmatpush.bf16.msra.mxu0 %v386
    %431 = vmatpush.bf16.msra.mxu0 %v350
    %432 = vmatpush.bf16.msra.mxu0 %v346
    %433 = vmatpush.bf16.msra.mxu0 %v342
    %434 = vmatpush.bf16.msra.mxu0 %v338
    %435 = vmatmul.bf16.gmra.mxu0 %v373
    %v436 = vpop.f32.mrf.mxu0
    %v437 = vadd.f32 0.0, %v436
    %v438 = vpop.f32.mrf.mxu0
    %439 = vdwg.mxu0
    %v440 = vld [vmem:[%s3] sm:$0xff]
    %v441 = vld [vmem:[%s4] sm:$0xff]
    %v442 = vadd.f32 %v398, %v411
    %443 = vadd.xlane.f32.xlu0 %v442
    %v444 = vpop.xlane.xlu0 %443
    %v445 = vmul.f32 %v444, 0.00390625
    %v446 = vmul.f32 %v398, %v398
    %v447 = vmul.f32 %v411, %v411
    %v448 = vadd.f32 %v446, %v447
    %449 = vadd.xlane.f32.xlu0 %v448
    %v450 = vpop.xlane.xlu0 %449
    %v451 = vmul.f32 %v450, 0.00390625
    %v452 = vmul.f32 %v445, %v445
    %v453 = vsub.f32 %v451, %v452
    %v454 = vadd.f32 %v453, 1e-05
    %v455 = vrsqrt.pop %v454
    %v456 = vmul.f32 %v455, %v454
    %v457 = vmul.f32 %v456, %v455
    %v458 = vmul.f32 0.5, %v457
    %v459 = vsub.f32 1.5, %v458
    %v460 = vmul.f32 %v455, %v459
    %vm461 = vweird.f32 %v454
    %vm462 = vweird.f32 %v455
    %vm463 = vmor %vm461, %vm462
    %v464 = vsel %vm463, %v455, %v460
    %v465 = vmul.f32 %v440, %v464
    %v466 = vmul.f32 %v445, %v465
    %v467 = vsub.f32 %v441, %v466
    %469 = vset.pattern.permute.xlu0 0
    %470 = vperm.xlu0 %469, %v465
    %v471 = vpop.permute.xlu0 %470
    %v473 = vmul.f32 %v398, %v471
    %v474 = vmul.f32 %v411, %v471
    %476 = vset.pattern.permute.xlu0 0
    %477 = vperm.xlu0 %476, %v467
    %v478 = vpop.permute.xlu0 %477
    %v480 = vadd.f32 %v473, %v478
    %v481 = vadd.f32 %v474, %v478
    %v482 = vmax.f32 %v480, 0.0
    %v483 = vmax.f32 %v481, 0.0
    %v484 = vadd.f32 %v424, %v437
    %485 = vadd.xlane.f32.xlu0 %v484
    %v486 = vpop.xlane.xlu0 %485
    %v487 = vmul.f32 %v486, 0.00390625
    %v488 = vmul.f32 %v424, %v424
    %v489 = vmul.f32 %v437, %v437
    %v490 = vadd.f32 %v488, %v489
    %491 = vadd.xlane.f32.xlu0 %v490
    %v492 = vpop.xlane.xlu0 %491
    %v493 = vmul.f32 %v492, 0.00390625
    %v494 = vmul.f32 %v487, %v487
    %v495 = vsub.f32 %v493, %v494
    %v496 = vadd.f32 %v495, 1e-05
    %v497 = vrsqrt.pop %v496
    %v498 = vmul.f32 %v497, %v496
    %v499 = vmul.f32 %v498, %v497
    %v500 = vmul.f32 0.5, %v499
    %v501 = vsub.f32 1.5, %v500
    %v502 = vmul.f32 %v497, %v501
    %vm503 = vweird.f32 %v496
    %vm504 = vweird.f32 %v497
    %vm505 = vmor %vm503, %vm504
    %v506 = vsel %vm505, %v497, %v502
    %v507 = vmul.f32 %v440, %v506
    %v508 = vmul.f32 %v487, %v507
    %v509 = vsub.f32 %v441, %v508
    %511 = vset.pattern.permute.xlu0 0
    %512 = vperm.xlu0 %511, %v507
    %v513 = vpop.permute.xlu0 %512
    %v515 = vmul.f32 %v424, %v513
    %v516 = vmul.f32 %v437, %v513
    %518 = vset.pattern.permute.xlu0 0
    %519 = vperm.xlu0 %518, %v509
    %v520 = vpop.permute.xlu0 %519
    %v522 = vadd.f32 %v515, %v520
    %v523 = vadd.f32 %v516, %v520
    %v524 = vmax.f32 %v522, 0.0
    %v525 = vmax.f32 %v523, 0.0
    %526 = vrot.lane.b32.xlu0 %v482, 17
    %v527 = vpop.permute.xlu0 %526
    %528 = vrot.lane.b32.xlu0 %v483, 17
    %v529 = vpop.permute.xlu0 %528
    %v530 = vsel %vm75, %v527, %v529
    %v531 = vsel %vm75, %v529, %v527
    %v532 = vmul.f32 %v531, %v78
    %v533 = vmul.f32 %v530, %v79
    %v534 = vpack.c.bf16 %v533, %v532
    %535 = vst [vmem:[#allocation3] sm:$0xff] %v534
    %536 = vrot.lane.b32.xlu0 %v482, 16
    %v537 = vpop.permute.xlu0 %536
    %538 = vrot.lane.b32.xlu0 %v483, 16
    %v539 = vpop.permute.xlu0 %538
    %v540 = vsel %vm88, %v537, %v539
    %v541 = vsel %vm88, %v539, %v537
    %v542 = vmul.f32 %v541, %v91
    %v543 = vmul.f32 %v540, %v92
    %v544 = vpack.c.bf16 %v543, %v542
    %545 = vst [vmem:[#allocation3 + $0x10] sm:$0xff] %v544
    %546 = vrot.lane.b32.xlu0 %v482, 15
    %v547 = vpop.permute.xlu0 %546
    %548 = vrot.lane.b32.xlu0 %v483, 15
    %v549 = vpop.permute.xlu0 %548
    %v550 = vsel %vm101, %v547, %v549
    %v551 = vsel %vm101, %v549, %v547
    %v552 = vmul.f32 %v551, %v104
    %v553 = vmul.f32 %v550, %v105
    %v554 = vpack.c.bf16 %v553, %v552
    %555 = vst [vmem:[#allocation3 + $0x20] sm:$0xff] %v554
    %556 = vrot.lane.b32.xlu0 %v482, 1
    %v557 = vpop.permute.xlu0 %556
    %558 = vrot.lane.b32.xlu0 %v483, 1
    %v559 = vpop.permute.xlu0 %558
    %v560 = vsel %vm114, %v557, %v559
    %v561 = vsel %vm114, %v559, %v557
    %v562 = vmul.f32 %v561, %v117
    %v563 = vmul.f32 %v560, %v118
    %v564 = vpack.c.bf16 %v563, %v562
    %565 = vst [vmem:[#allocation3 + $0x30] sm:$0xff] %v564
    %v566 = vpack.c.bf16 %v483, %v482
    %567 = vst [vmem:[#allocation3 + $0x40] sm:$0xff] %v566
    %568 = vrot.lane.b32.xlu0 %v482, 127
    %v569 = vpop.permute.xlu0 %568
    %570 = vrot.lane.b32.xlu0 %v483, 127
    %v571 = vpop.permute.xlu0 %570
    %v572 = vsel %vm129, %v569, %v571
    %v573 = vsel %vm129, %v571, %v569
    %v574 = vmul.f32 %v572, %v132
    %v575 = vmul.f32 %v573, %v133
    %v576 = vpack.c.bf16 %v575, %v574
    %577 = vst [vmem:[#allocation3 + $0x50] sm:$0xff] %v576
    %578 = vrot.lane.b32.xlu0 %v482, 113
    %v579 = vpop.permute.xlu0 %578
    %580 = vrot.lane.b32.xlu0 %v483, 113
    %v581 = vpop.permute.xlu0 %580
    %v582 = vsel %vm142, %v579, %v581
    %v583 = vsel %vm142, %v581, %v579
    %v584 = vmul.f32 %v582, %v145
    %v585 = vmul.f32 %v583, %v146
    %v586 = vpack.c.bf16 %v585, %v584
    %587 = vst [vmem:[#allocation3 + $0x60] sm:$0xff] %v586
    %588 = vrot.lane.b32.xlu0 %v482, 112
    %v589 = vpop.permute.xlu0 %588
    %590 = vrot.lane.b32.xlu0 %v483, 112
    %v591 = vpop.permute.xlu0 %590
    %v592 = vsel %vm155, %v589, %v591
    %v593 = vsel %vm155, %v591, %v589
    %v594 = vmul.f32 %v592, %v158
    %v595 = vmul.f32 %v593, %v159
    %v596 = vpack.c.bf16 %v595, %v594
    %597 = vst [vmem:[#allocation3 + $0x70] sm:$0xff] %v596
    %598 = vrot.lane.b32.xlu0 %v482, 111
    %v599 = vpop.permute.xlu0 %598
    %600 = vrot.lane.b32.xlu0 %v483, 111
    %v601 = vpop.permute.xlu0 %600
    %v602 = vsel %vm168, %v599, %v601
    %v603 = vsel %vm168, %v601, %v599
    %v604 = vmul.f32 %v602, %v171
    %v605 = vmul.f32 %v603, %v172
    %v606 = vpack.c.bf16 %v605, %v604
    %607 = vst [vmem:[#allocation3 + $0x80] sm:$0xff] %v606
    %608 = vrot.lane.b32.xlu0 %v524, 17
    %v609 = vpop.permute.xlu0 %608
    %610 = vrot.lane.b32.xlu0 %v525, 17
    %v611 = vpop.permute.xlu0 %610
    %v612 = vsel %vm75, %v609, %v611
    %v613 = vsel %vm75, %v611, %v609
    %v614 = vmul.f32 %v613, %v78
    %v615 = vmul.f32 %v612, %v79
    %v616 = vpack.c.bf16 %v615, %v614
    %617 = vst [vmem:[#allocation3 + $0x8] sm:$0xff] %v616
    %618 = vrot.lane.b32.xlu0 %v524, 16
    %v619 = vpop.permute.xlu0 %618
    %620 = vrot.lane.b32.xlu0 %v525, 16
    %v621 = vpop.permute.xlu0 %620
    %v622 = vsel %vm88, %v619, %v621
    %v623 = vsel %vm88, %v621, %v619
    %v624 = vmul.f32 %v623, %v91
    %v625 = vmul.f32 %v622, %v92
    %v626 = vpack.c.bf16 %v625, %v624
    %627 = vst [vmem:[#allocation3 + $0x18] sm:$0xff] %v626
    %628 = vrot.lane.b32.xlu0 %v524, 15
    %v629 = vpop.permute.xlu0 %628
    %630 = vrot.lane.b32.xlu0 %v525, 15
    %v631 = vpop.permute.xlu0 %630
    %v632 = vsel %vm101, %v629, %v631
    %v633 = vsel %vm101, %v631, %v629
    %v634 = vmul.f32 %v633, %v104
    %v635 = vmul.f32 %v632, %v105
    %v636 = vpack.c.bf16 %v635, %v634
    %637 = vst [vmem:[#allocation3 + $0x28] sm:$0xff] %v636
    %638 = vrot.lane.b32.xlu0 %v524, 1
    %v639 = vpop.permute.xlu0 %638
    %640 = vrot.lane.b32.xlu0 %v525, 1
    %v641 = vpop.permute.xlu0 %640
    %v642 = vsel %vm114, %v639, %v641
    %v643 = vsel %vm114, %v641, %v639
    %v644 = vmul.f32 %v643, %v117
    %v645 = vmul.f32 %v642, %v118
    %v646 = vpack.c.bf16 %v645, %v644
    %647 = vst [vmem:[#allocation3 + $0x38] sm:$0xff] %v646
    %v648 = vpack.c.bf16 %v525, %v524
    %649 = vst [vmem:[#allocation3 + $0x48] sm:$0xff] %v648
    %650 = vrot.lane.b32.xlu0 %v524, 127
    %v651 = vpop.permute.xlu0 %650
    %652 = vrot.lane.b32.xlu0 %v525, 127
    %v653 = vpop.permute.xlu0 %652
    %v654 = vsel %vm129, %v651, %v653
    %v655 = vsel %vm129, %v653, %v651
    %v656 = vmul.f32 %v654, %v132
    %v657 = vmul.f32 %v655, %v133
    %v658 = vpack.c.bf16 %v657, %v656
    %659 = vst [vmem:[#allocation3 + $0x58] sm:$0xff] %v658
    %660 = vrot.lane.b32.xlu0 %v524, 113
    %v661 = vpop.permute.xlu0 %660
    %662 = vrot.lane.b32.xlu0 %v525, 113
    %v663 = vpop.permute.xlu0 %662
    %v664 = vsel %vm142, %v661, %v663
    %v665 = vsel %vm142, %v663, %v661
    %v666 = vmul.f32 %v664, %v145
    %v667 = vmul.f32 %v665, %v146
    %v668 = vpack.c.bf16 %v667, %v666
    %669 = vst [vmem:[#allocation3 + $0x68] sm:$0xff] %v668
    %670 = vrot.lane.b32.xlu0 %v524, 112
    %v671 = vpop.permute.xlu0 %670
    %672 = vrot.lane.b32.xlu0 %v525, 112
    %v673 = vpop.permute.xlu0 %672
    %v674 = vsel %vm155, %v671, %v673
    %v675 = vsel %vm155, %v673, %v671
    %v676 = vmul.f32 %v674, %v158
    %v677 = vmul.f32 %v675, %v159
    %v678 = vpack.c.bf16 %v677, %v676
    %679 = vst [vmem:[#allocation3 + $0x78] sm:$0xff] %v678
    %680 = vrot.lane.b32.xlu0 %v524, 111
    %v681 = vpop.permute.xlu0 %680
    %682 = vrot.lane.b32.xlu0 %v525, 111
    %v683 = vpop.permute.xlu0 %682
    %v684 = vsel %vm168, %v681, %v683
    %v685 = vsel %vm168, %v683, %v681
    %v686 = vmul.f32 %v684, %v171
    %v687 = vmul.f32 %v685, %v172
    %v688 = vpack.c.bf16 %v687, %v686
    %689 = vst [vmem:[#allocation3 + $0x88] sm:$0xff] %v688
    %v690 = vld [vmem:[%s5] sm:$0xf]
    %v691 = vld [vmem:[#allocation3] sm:$0xff]
    %v692 = vld [vmem:[#allocation3 + $0x8] sm:$0xff]
    %v693 = vld [vmem:[#allocation3 + $0x10] sm:$0xff]
    %v694 = vld [vmem:[#allocation3 + $0x18] sm:$0xff]
    %v695 = vld [vmem:[#allocation3 + $0x20] sm:$0xff]
    %v696 = vld [vmem:[#allocation3 + $0x28] sm:$0xff]
    %v697 = vld [vmem:[#allocation3 + $0x30] sm:$0xff]
    %v698 = vld [vmem:[#allocation3 + $0x38] sm:$0xff]
    %v699 = vld [vmem:[#allocation3 + $0x40] sm:$0xff]
    %v700 = vld [vmem:[#allocation3 + $0x48] sm:$0xff]
    %v701 = vld [vmem:[#allocation3 + $0x50] sm:$0xff]
    %v702 = vld [vmem:[#allocation3 + $0x58] sm:$0xff]
    %v703 = vld [vmem:[#allocation3 + $0x60] sm:$0xff]
    %v704 = vld [vmem:[#allocation3 + $0x68] sm:$0xff]
    %v705 = vld [vmem:[#allocation3 + $0x70] sm:$0xff]
    %v706 = vld [vmem:[#allocation3 + $0x78] sm:$0xff]
    %v707 = vld [vmem:[#allocation3 + $0x80] sm:$0xff]
    %v708 = vld [vmem:[#allocation3 + $0x88] sm:$0xff]
    %v727 = vunpack.c.l.b16 %v691
    %v728 = vunpack.c.h.b16 %v691
    %v729 = vunpack.c.l.b16 %v692
    %v730 = vunpack.c.h.b16 %v692
    %v731 = vunpack.c.l.b16 %v693
    %v732 = vunpack.c.h.b16 %v693
    %v733 = vunpack.c.l.b16 %v694
    %v734 = vunpack.c.h.b16 %v694
    %v735 = vunpack.c.l.b16 %v695
    %v736 = vunpack.c.h.b16 %v695
    %v737 = vunpack.c.l.b16 %v696
    %v738 = vunpack.c.h.b16 %v696
    %v739 = vunpack.c.l.b16 %v697
    %v740 = vunpack.c.h.b16 %v697
    %v741 = vunpack.c.l.b16 %v698
    %v742 = vunpack.c.h.b16 %v698
    %v743 = vunpack.c.l.b16 %v699
    %v744 = vunpack.c.h.b16 %v699
    %v745 = vunpack.c.l.b16 %v700
    %v746 = vunpack.c.h.b16 %v700
    %v747 = vunpack.c.l.b16 %v701
    %v748 = vunpack.c.h.b16 %v701
    %v749 = vunpack.c.l.b16 %v702
    %v750 = vunpack.c.h.b16 %v702
    %v751 = vunpack.c.l.b16 %v703
    %v752 = vunpack.c.h.b16 %v703
    %v753 = vunpack.c.l.b16 %v704
    %v754 = vunpack.c.h.b16 %v704
    %v755 = vunpack.c.l.b16 %v705
    %v756 = vunpack.c.h.b16 %v705
    %v757 = vunpack.c.l.b16 %v706
    %v758 = vunpack.c.h.b16 %v706
    %v759 = vunpack.c.l.b16 %v707
    %v760 = vunpack.c.h.b16 %v707
    %v761 = vunpack.c.l.b16 %v708
    %v762 = vunpack.c.h.b16 %v708
    %v763 = vpack.c.b16 %v731, %v727
    %v764 = vpack.c.b16 %v732, %v728
    %v765 = vpack.c.b16 %v733, %v729
    %v766 = vpack.c.b16 %v734, %v730
    %v767 = vpack.c.b16 %v739, %v735
    %v768 = vpack.c.b16 %v740, %v736
    %v769 = vpack.c.b16 %v741, %v737
    %v770 = vpack.c.b16 %v742, %v738
    %v771 = vpack.c.b16 %v747, %v743
    %v772 = vpack.c.b16 %v748, %v744
    %v773 = vpack.c.b16 %v749, %v745
    %v774 = vpack.c.b16 %v750, %v746
    %v775 = vpack.c.b16 %v755, %v751
    %v776 = vpack.c.b16 %v756, %v752
    %v777 = vpack.c.b16 %v757, %v753
    %v778 = vpack.c.b16 %v758, %v754
    %v779 = vpack.c.b16 %v759, %v759
    %v780 = vpack.c.b16 %v760, %v760
    %v781 = vpack.c.b16 %v761, %v761
    %v782 = vpack.c.b16 %v762, %v762
    %v800 = vsel %vm371, %v690, 0
    %v803 = vsel %vm375, %v779, 0
    %v806 = vsel %vm375, %v780, 0
    %v809 = vsel %vm375, %v781, 0
    %v812 = vsel %vm375, %v782, 0
    %814 = vmatpush.bf16.msra.mxu0 0
    %815 = vmatpush.bf16.msra.mxu0 0
    %816 = vmatpush.bf16.msra.mxu0 0
    %817 = vmatpush.bf16.msra.mxu0 %v803
    %818 = vmatpush.bf16.msra.mxu0 %v775
    %819 = vmatpush.bf16.msra.mxu0 %v771
    %820 = vmatpush.bf16.msra.mxu0 %v767
    %821 = vmatpush.bf16.msra.mxu0 %v763
    %822 = vmatmul.bf16.gmra.mxu0 %v800
    %v823 = vpop.f32.mrf.mxu0
    %v824 = vadd.f32 0.0, %v823
    %v825 = vpop.f32.mrf.mxu0
    %826 = vdwg.mxu0
    %827 = vmatpush.bf16.msra.mxu0 0
    %828 = vmatpush.bf16.msra.mxu0 0
    %829 = vmatpush.bf16.msra.mxu0 0
    %830 = vmatpush.bf16.msra.mxu0 %v806
    %831 = vmatpush.bf16.msra.mxu0 %v776
    %832 = vmatpush.bf16.msra.mxu0 %v772
    %833 = vmatpush.bf16.msra.mxu0 %v768
    %834 = vmatpush.bf16.msra.mxu0 %v764
    %835 = vmatmul.bf16.gmra.mxu0 %v800
    %v836 = vpop.f32.mrf.mxu0
    %v837 = vadd.f32 0.0, %v836
    %v838 = vpop.f32.mrf.mxu0
    %839 = vdwg.mxu0
    %840 = vmatpush.bf16.msra.mxu0 0
    %841 = vmatpush.bf16.msra.mxu0 0
    %842 = vmatpush.bf16.msra.mxu0 0
    %843 = vmatpush.bf16.msra.mxu0 %v809
    %844 = vmatpush.bf16.msra.mxu0 %v777
    %845 = vmatpush.bf16.msra.mxu0 %v773
    %846 = vmatpush.bf16.msra.mxu0 %v769
    %847 = vmatpush.bf16.msra.mxu0 %v765
    %848 = vmatmul.bf16.gmra.mxu0 %v800
    %v849 = vpop.f32.mrf.mxu0
    %v850 = vadd.f32 0.0, %v849
    %v851 = vpop.f32.mrf.mxu0
    %852 = vdwg.mxu0
    %853 = vmatpush.bf16.msra.mxu0 0
    %854 = vmatpush.bf16.msra.mxu0 0
    %855 = vmatpush.bf16.msra.mxu0 0
    %856 = vmatpush.bf16.msra.mxu0 %v812
    %857 = vmatpush.bf16.msra.mxu0 %v778
    %858 = vmatpush.bf16.msra.mxu0 %v774
    %859 = vmatpush.bf16.msra.mxu0 %v770
    %860 = vmatpush.bf16.msra.mxu0 %v766
    %861 = vmatmul.bf16.gmra.mxu0 %v800
    %v862 = vpop.f32.mrf.mxu0
    %v863 = vadd.f32 0.0, %v862
    %v864 = vpop.f32.mrf.mxu0
    %865 = vdwg.mxu0
    %v866 = vld [vmem:[%s6] sm:$0xff]
    %v867 = vld [vmem:[%s7] sm:$0xff]
    %v868 = vadd.f32 %v824, %v837
    %869 = vadd.xlane.f32.xlu0 %v868
    %v870 = vpop.xlane.xlu0 %869
    %v871 = vmul.f32 %v870, 0.00390625
    %v872 = vmul.f32 %v824, %v824
    %v873 = vmul.f32 %v837, %v837
    %v874 = vadd.f32 %v872, %v873
    %875 = vadd.xlane.f32.xlu0 %v874
    %v876 = vpop.xlane.xlu0 %875
    %v877 = vmul.f32 %v876, 0.00390625
    %v878 = vmul.f32 %v871, %v871
    %v879 = vsub.f32 %v877, %v878
    %v880 = vadd.f32 %v879, 1e-05
    %v881 = vrsqrt.pop %v880
    %v882 = vmul.f32 %v881, %v880
    %v883 = vmul.f32 %v882, %v881
    %v884 = vmul.f32 0.5, %v883
    %v885 = vsub.f32 1.5, %v884
    %v886 = vmul.f32 %v881, %v885
    %vm887 = vweird.f32 %v880
    %vm888 = vweird.f32 %v881
    %vm889 = vmor %vm887, %vm888
    %v890 = vsel %vm889, %v881, %v886
    %v891 = vmul.f32 %v866, %v890
    %v892 = vmul.f32 %v871, %v891
    %v893 = vsub.f32 %v867, %v892
    %895 = vset.pattern.permute.xlu0 0
    %896 = vperm.xlu0 %895, %v891
    %v897 = vpop.permute.xlu0 %896
    %v899 = vmul.f32 %v824, %v897
    %v900 = vmul.f32 %v837, %v897
    %902 = vset.pattern.permute.xlu0 0
    %903 = vperm.xlu0 %902, %v893
    %v904 = vpop.permute.xlu0 %903
    %v906 = vadd.f32 %v899, %v904
    %v907 = vadd.f32 %v900, %v904
    %v908 = vmax.f32 %v906, 0.0
    %v909 = vmax.f32 %v907, 0.0
    %v910 = vadd.f32 %v850, %v863
    %911 = vadd.xlane.f32.xlu0 %v910
    %v912 = vpop.xlane.xlu0 %911
    %v913 = vmul.f32 %v912, 0.00390625
    %v914 = vmul.f32 %v850, %v850
    %v915 = vmul.f32 %v863, %v863
    %v916 = vadd.f32 %v914, %v915
    %917 = vadd.xlane.f32.xlu0 %v916
    %v918 = vpop.xlane.xlu0 %917
    %v919 = vmul.f32 %v918, 0.00390625
    %v920 = vmul.f32 %v913, %v913
    %v921 = vsub.f32 %v919, %v920
    %v922 = vadd.f32 %v921, 1e-05
    %v923 = vrsqrt.pop %v922
    %v924 = vmul.f32 %v923, %v922
    %v925 = vmul.f32 %v924, %v923
    %v926 = vmul.f32 0.5, %v925
    %v927 = vsub.f32 1.5, %v926
    %v928 = vmul.f32 %v923, %v927
    %vm929 = vweird.f32 %v922
    %vm930 = vweird.f32 %v923
    %vm931 = vmor %vm929, %vm930
    %v932 = vsel %vm931, %v923, %v928
    %v933 = vmul.f32 %v866, %v932
    %v934 = vmul.f32 %v913, %v933
    %v935 = vsub.f32 %v867, %v934
    %937 = vset.pattern.permute.xlu0 0
    %938 = vperm.xlu0 %937, %v933
    %v939 = vpop.permute.xlu0 %938
    %v941 = vmul.f32 %v850, %v939
    %v942 = vmul.f32 %v863, %v939
    %944 = vset.pattern.permute.xlu0 0
    %945 = vperm.xlu0 %944, %v935
    %v946 = vpop.permute.xlu0 %945
    %v948 = vadd.f32 %v941, %v946
    %v949 = vadd.f32 %v942, %v946
    %v950 = vmax.f32 %v948, 0.0
    %v951 = vmax.f32 %v949, 0.0
    %952 = vst [vmem:[#allocation9] sm:$0xff] %v908
    %953 = vst [vmem:[#allocation9 + $0x8] sm:$0xff] %v909
    %s954 = scalar_lea.vmem [#allocation9], 16
    %955 = vst [vmem:[%s954] sm:$0xff] %v950
    %956 = vst [vmem:[%s954 + $0x8] sm:$0xff] %v951
    // Predicated region
    $region42: #{tpu_custom_call.1} parent=1 // pred_check
      _
    $region43: #{tpu_custom_call.1} parent=1 // pred_check_branch
      %958 = sbr.rel (0) target = $region45
    $region44: #{tpu_custom_call.1} parent=1 // pred_region
      %960 = vsyncadd [#allocation6], 0
      %s961 = sshll.u32 [#allocation9], 4
      %s962 = int_to_ptr.vmem [resolvable:$true] %s961
      %s963 = sshll.u32 %s8, 4
      %s964 = int_to_ptr.hbm [resolvable:$true] %s963
      %969 = dma.vmem_to_hbm [thread:$0]  %s962, 512, %s964, [#allocation6], 256, 256, 16
    $region45: #{tpu_custom_call.1} parent=1 // pred_fallthru
      _
    // Predicated region
    $region46: #{tpu_custom_call.1} parent=1 // pred_check
      _
    $region47: #{tpu_custom_call.1} parent=1 // pred_check_branch
      %971 = sbr.rel (0) target = $region49
    $region48: #{tpu_custom_call.1} parent=1 // pred_region
      %973 = dma.done [#allocation6], 512
    $region49: #{tpu_custom_call.1} parent=1 // pred_fallthru
      _
    %974 = vsyncpa [#allocation5], 1
    %975 = vsyncpa [#allocation8], 1
    %976 = vsyncpa [#allocation6], 1

</llo_original>
